<compile_context>
chip_gen: v7x
topology: tpu7x:2x2x1
jax: 0.10.0
libtpu: 0.0.40
codegen_flags: <defaults>
</compile_context>

<pallas_src>
import functools
import math

import jax
import jax.numpy as jnp
from jax.experimental import pallas as pl
from jax.experimental.pallas import tpu as pltpu


def essa_kernel(x_ref, w_qkv_ref, b_qkv_ref, w_ln_ref, b_ln_ref, o_ref,
                attn_sc, *, N, C, block_b):
    f32 = jnp.float32
    rows = block_b * N
    # (block_b, N, C) -> (block_b*N, C): token-local stages on merged rows.
    x2 = x_ref[...].reshape(rows, C)

    # Fused QKV projection: one MXU weight-push, (rows, 3C) output fills the
    # MXU column dim when C < 256; f32 accumulation, operands in model dtype.
    qkv = jax.lax.dot_general(x2, w_qkv_ref[...], (((1,), (0,)), ((), ())),
                              preferred_element_type=f32)
    qkv = qkv + b_qkv_ref[...].astype(f32)

    # ---- q path first (fully consumed before k/v -> fewer live f32 tensors).
    q = qkv[:, :C]
    q = q - jnp.mean(q, axis=-1, keepdims=True)
    q2 = q * q
    # The reference's /(q2s+1e-7) is a positive per-row scalar that cancels
    # under the row L2 normalize -> dropped.  1/sqrt(N) is folded into the
    # (rows, 1) normalization factor; rsqrt runs on the EUP.
    q2 = q2 * (jax.lax.rsqrt(
        jnp.maximum(jnp.sum(q2 * q2, axis=-1, keepdims=True), 1e-24))
        * (1.0 / math.sqrt(N)))

    # ---- k path.
    k = qkv[:, C:2 * C]
    k = k - jnp.mean(k, axis=-1, keepdims=True)
    k2 = k * k
    # Exact reciprocal of the (rows, 1) denominator then a broadcast multiply
    # (one EUP reciprocal per row instead of per element).
    k2 = k2 * (1.0 / (jnp.sum(k2, axis=-1, keepdims=True) + 1e-7))

    v = qkv[:, 2 * C:]

    # ---- per-batch coupling: token-axis L2 norm of k2 + attention product.
    # block_b is small & static -> unrolled loop, 2D dots only.
    use_scores = N < C   # (q2 k2^T) v: 4*N^2*C flops; k2^T v: 4*N*C^2 flops.
    attn = None
    for i in range(block_b):
        lo = i * N
        k2_i = k2[lo:lo + N, :]
        v_i = v[lo:lo + N, :]
        q2_i = q2[lo:lo + N, :]
        # F.normalize(..., dim=-2): L2 over tokens, eps folded into max().
        k2_i = k2_i * jax.lax.rsqrt(
            jnp.maximum(jnp.sum(k2_i * k2_i, axis=0, keepdims=True), 1e-24))
        if use_scores:
            s_i = jax.lax.dot_general(q2_i, k2_i, (((1,), (1,)), ((), ())),
                                      preferred_element_type=f32)    # (N, N)
            t2_i = jnp.dot(s_i, v_i, preferred_element_type=f32)
        else:
            kv_i = jax.lax.dot_general(k2_i, v_i, (((0,), (0,)), ((), ())),
                                       preferred_element_type=f32)   # (C, C)
            t2_i = jnp.dot(q2_i, kv_i, preferred_element_type=f32)
        if block_b == 1:
            attn = v_i + t2_i                    # t1 + t2
        else:
            attn_sc[pl.ds(lo, N), :] = v_i + t2_i   # static, sublane-aligned
    if block_b > 1:
        attn = attn_sc[...]

    # Final Linear on the merged rows (pre-transposed weight, f32 accumulate).
    out = jax.lax.dot_general(attn.astype(w_ln_ref.dtype), w_ln_ref[...],
                              (((1,), (0,)), ((), ())),
                              preferred_element_type=f32)
    out = out + b_ln_ref[...].astype(f32)
    o_ref[...] = out.astype(o_ref.dtype).reshape(block_b, N, C)


def _vmem_limit_bytes():
    """Generation-aware scoped-VMEM budget (v5e/v6e: 128 MiB phys, v7x: 64)."""
    mib = 1024 * 1024
    try:
        phys = getattr(pltpu.get_tpu_info(), "vmem_capacity_bytes", None)
    except Exception:
        phys = None
    if phys is None:
        return 32 * mib                         # safe default on every gen
    if phys >= 128 * mib:                       # v5e / v6e
        return 64 * mib
    return min(48 * mib, (phys * 3) // 4)       # v7x-class (64 MiB physical)


def _pick_block_b(B, N, C, itemsize, vmem_limit):
    """Largest divisor of B whose merged rows fit the VMEM budget and which
    keeps >= 2 grid steps (v7x has 2 TensorCores sharding 'parallel' axes)."""
    # Rough per-row live bytes: fused qkv (3C) + ~8 f32 (rows, C) intermediates
    # + double-buffered x/o tiles in the model dtype.
    per_row = (3 * C + 8 * C) * 4 + 4 * C * itemsize
    weight_bytes = (3 * C * C + C * C + 4 * C) * 4 * 2   # worst case (2-buf)
    rows_cap = max((vmem_limit - weight_bytes) // per_row, N)
    best = 1
    for cand in range(1, B + 1):
        if B % cand:
            continue
        if cand * N > rows_cap:
            continue
        if B >= 2 and B // cand < 2:
            continue                       # keep both TensorCores busy on v7x
        best = max(best, cand)
    return best


def essa_attn(x, w_qkv, b_qkv, w_ln, b_ln, *, block_b=None,
              vmem_limit_bytes=None):
    B, N, C = x.shape
    if vmem_limit_bytes is None:
        vmem_limit_bytes = _vmem_limit_bytes()
    if block_b is None:
        block_b = _pick_block_b(B, N, C, x.dtype.itemsize, vmem_limit_bytes)
    assert B % block_b == 0

    # One-time host-side weight prep: fused, pre-transposed QKV weight so the
    # kernel does a single x @ W matmul and only lane-slices the activations.
    w_qkv_t = jnp.asarray(w_qkv).T              # (C, 3C), lanes [q | k | v]
    b_qkv2 = jnp.asarray(b_qkv).reshape(1, 3 * C)
    w_ln_t = jnp.asarray(w_ln).T                # (C, C)
    b_ln2 = jnp.asarray(b_ln).reshape(1, C)

    kernel = functools.partial(essa_kernel, N=N, C=C, block_b=block_b)

    def call(single_buffer_weights):
        def const_spec(shape):
            idx = lambda b, _shape=shape: (0,) * len(_shape)
            if single_buffer_weights:
                # Constant index_map -> never re-fetched; don't double-buffer.
                return pl.BlockSpec(shape, idx, pipeline_mode=pl.Buffered(1))
            return pl.BlockSpec(shape, idx)

        grid_spec = pltpu.PrefetchScalarGridSpec(
            num_scalar_prefetch=0,
            grid=(B // block_b,),
            in_specs=[
                pl.BlockSpec((block_b, N, C), lambda b: (b, 0, 0)),   # x
                const_spec((C, 3 * C)),                               # w_qkv^T
                const_spec((1, 3 * C)),                               # b_qkv
                const_spec((C, C)),                                   # w_ln^T
                const_spec((1, C)),                                   # b_ln
            ],
            out_specs=pl.BlockSpec((block_b, N, C), lambda b: (b, 0, 0)),
            scratch_shapes=[pltpu.VMEM((block_b * N, C), jnp.float32)],
        )
        return pl.pallas_call(
            kernel,
            out_shape=jax.ShapeDtypeStruct((B, N, C), x.dtype),
            grid_spec=grid_spec,
            compiler_params=pltpu.CompilerParams(
                dimension_semantics=("parallel",),
                vmem_limit_bytes=vmem_limit_bytes,
            ),
        )(x, w_qkv_t, b_qkv2, w_ln_t, b_ln2)

    try:
        return jax.block_until_ready(call(True))
    except Exception:
        # Older Pallas without BlockSpec(pipeline_mode=...): default buffering.
        return jax.block_until_ready(call(False))


def essa_attn_ref(x, w_qkv, b_qkv, w_ln, b_ln):
    """Pure-JAX reference mirroring the PyTorch forward exactly."""
    B, N, C = x.shape
    qkv = jnp.einsum('bnc,oc->bno', x, w_qkv) + b_qkv
    q, k, v = qkv[..., :C], qkv[..., C:2 * C], qkv[..., 2 * C:]
    q = q - q.mean(-1, keepdims=True)
    k = k - k.mean(-1, keepdims=True)
    q2 = q ** 2
    k2 = k ** 2
    q2s = q2.sum(-1, keepdims=True)
    k2s = k2.sum(-1, keepdims=True)
    t1 = v
    k2 = k2 / (k2s + 1e-7)
    k2 = k2 / jnp.maximum(jnp.sqrt((k2 ** 2).sum(-2, keepdims=True)), 1e-12)
    q2 = q2 / (q2s + 1e-7)
    q2 = q2 / jnp.maximum(jnp.sqrt((q2 ** 2).sum(-1, keepdims=True)), 1e-12)
    t2 = jnp.einsum('bnc,bcd->bnd', q2,
                    jnp.einsum('bnc,bnd->bcd', k2, v)) / math.sqrt(N)
    attn = t1 + t2
    return jnp.einsum('bnc,oc->bno', attn, w_ln) + b_ln


if __name__ == "__main__":
    B, N, C = 2, 16, 32
    key = jax.random.PRNGKey(0)
    kx, kw1, kb1, kw2, kb2 = jax.random.split(key, 5)

    x = jax.random.normal(kx, (B, N, C), dtype=jnp.float32)
    # PyTorch Linear shapes: weight (out, in), bias (out,)
    w_qkv = jax.random.normal(kw1, (3 * C, C), dtype=jnp.float32) * (1.0 / math.sqrt(C))
    b_qkv = jax.random.normal(kb1, (3 * C,), dtype=jnp.float32) * 0.01
    w_ln = jax.random.normal(kw2, (C, C), dtype=jnp.float32) * (1.0 / math.sqrt(C))
    b_ln = jax.random.normal(kb2, (C,), dtype=jnp.float32) * 0.01

    out = essa_attn(x, w_qkv, b_qkv, w_ln, b_ln)
    out = jax.block_until_ready(out)

    ref = essa_attn_ref(x, w_qkv, b_qkv, w_ln, b_ln)
    assert out.shape == (B, N, C)
    assert jnp.allclose(out, ref, rtol=1e-4, atol=1e-4), "mismatch vs reference"

    print("KERNEL_OK")
</pallas_src>

<mosaic_0001>
module attributes {stable_mosaic.version = 11 : i64} {
  func.func @essa_kernel(%arg0: i32, %arg1: memref<1x16x32xf32, #tpu.memory_space<vmem>>, %arg2: memref<32x96xf32, #tpu.memory_space<vmem>>, %arg3: memref<1x96xf32, #tpu.memory_space<vmem>>, %arg4: memref<32x32xf32, #tpu.memory_space<vmem>>, %arg5: memref<1x32xf32, #tpu.memory_space<vmem>>, %arg6: memref<1x16x32xf32, #tpu.memory_space<vmem>>, %arg7: memref<16x32xf32, #tpu.memory_space<vmem>>) attributes {dimension_semantics = [#tpu.dimension_semantics<parallel>], iteration_bounds = array<i64: 2>, scalar_prefetch = 0 : i64, scratch_operands = 1 : i64, tpu.core_type = #tpu.core_type<tc>, window_params = [{transform_indices = @transform_0, window_bounds = array<i64: 1, 16, 32>}, {pipeline_mode = #tpu.pipeline_mode<synchronous>, transform_indices = @transform_1, window_bounds = array<i64: 32, 96>}, {pipeline_mode = #tpu.pipeline_mode<synchronous>, transform_indices = @transform_2, window_bounds = array<i64: 1, 96>}, {pipeline_mode = #tpu.pipeline_mode<synchronous>, transform_indices = @transform_3, window_bounds = array<i64: 32, 32>}, {pipeline_mode = #tpu.pipeline_mode<synchronous>, transform_indices = @transform_4, window_bounds = array<i64: 1, 32>}, {transform_indices = @transform_5, window_bounds = array<i64: 1, 16, 32>}]} {
    %c0 = arith.constant 0 : index
    %c0_0 = arith.constant 0 : index
    %c0_1 = arith.constant 0 : index
    %0 = vector.load %arg1[%c0, %c0_0, %c0_1] : memref<1x16x32xf32, #tpu.memory_space<vmem>>, vector<1x16x32xf32>
    %1 = vector.shape_cast %0 : vector<1x16x32xf32> to vector<16x32xf32>
    %c0_2 = arith.constant 0 : index
    %c0_3 = arith.constant 0 : index
    %2 = vector.load %arg2[%c0_2, %c0_3] : memref<32x96xf32, #tpu.memory_space<vmem>>, vector<32x96xf32>
    %cst = arith.constant dense<0.000000e+00> : vector<16x96xf32>
    %3 = tpu.matmul %1, %2, %cst {dimension_numbers = #tpu.dot_dimension_numbers<[1], [0], [0], [1], [0, 0, 1, 1], [], []>} : vector<16x32xf32>, vector<32x96xf32>, vector<16x96xf32> -> vector<16x96xf32>
    %c0_4 = arith.constant 0 : index
    %c0_5 = arith.constant 0 : index
    %4 = vector.load %arg3[%c0_4, %c0_5] : memref<1x96xf32, #tpu.memory_space<vmem>>, vector<1x96xf32>
    %5 = vector.broadcast %4 : vector<1x96xf32> to vector<16x96xf32>
    %6 = arith.addf %3, %5 : vector<16x96xf32>
    %7 = vector.extract_strided_slice %6 {offsets = [0, 0], sizes = [16, 32], strides = [1, 1]} : vector<16x96xf32> to vector<16x32xf32>
    %cst_6 = arith.constant dense<0.000000e+00> : vector<16xf32>
    %8 = vector.multi_reduction <add>, %7, %cst_6 [1] : vector<16x32xf32> to vector<16xf32>
    %9 = vector.shape_cast %8 : vector<16xf32> to vector<16x1xf32>
    %cst_7 = arith.constant 3.200000e+01 : f32
    %10 = vector.broadcast %cst_7 : f32 to vector<16x1xf32>
    %11 = arith.divf %9, %10 : vector<16x1xf32>
    %12 = vector.broadcast %11 : vector<16x1xf32> to vector<16x32xf32>
    %13 = arith.subf %7, %12 : vector<16x32xf32>
    %14 = arith.mulf %13, %13 : vector<16x32xf32>
    %15 = arith.mulf %14, %14 : vector<16x32xf32>
    %cst_8 = arith.constant dense<0.000000e+00> : vector<16xf32>
    %16 = vector.multi_reduction <add>, %15, %cst_8 [1] : vector<16x32xf32> to vector<16xf32>
    %17 = vector.shape_cast %16 : vector<16xf32> to vector<16x1xf32>
    %cst_9 = arith.constant 1.000000e-24 : f32
    %18 = vector.broadcast %cst_9 : f32 to vector<16x1xf32>
    %19 = arith.maximumf %17, %18 : vector<16x1xf32>
    %20 = math.rsqrt %19 : vector<16x1xf32>
    %cst_10 = arith.constant 2.500000e-01 : f32
    %21 = vector.broadcast %cst_10 : f32 to vector<16x1xf32>
    %22 = arith.mulf %20, %21 : vector<16x1xf32>
    %23 = vector.broadcast %22 : vector<16x1xf32> to vector<16x32xf32>
    %24 = arith.mulf %14, %23 : vector<16x32xf32>
    %25 = vector.extract_strided_slice %6 {offsets = [0, 32], sizes = [16, 32], strides = [1, 1]} : vector<16x96xf32> to vector<16x32xf32>
    %cst_11 = arith.constant dense<0.000000e+00> : vector<16xf32>
    %26 = vector.multi_reduction <add>, %25, %cst_11 [1] : vector<16x32xf32> to vector<16xf32>
    %27 = vector.shape_cast %26 : vector<16xf32> to vector<16x1xf32>
    %cst_12 = arith.constant 3.200000e+01 : f32
    %28 = vector.broadcast %cst_12 : f32 to vector<16x1xf32>
    %29 = arith.divf %27, %28 : vector<16x1xf32>
    %30 = vector.broadcast %29 : vector<16x1xf32> to vector<16x32xf32>
    %31 = arith.subf %25, %30 : vector<16x32xf32>
    %32 = arith.mulf %31, %31 : vector<16x32xf32>
    %cst_13 = arith.constant dense<0.000000e+00> : vector<16xf32>
    %33 = vector.multi_reduction <add>, %32, %cst_13 [1] : vector<16x32xf32> to vector<16xf32>
    %34 = vector.shape_cast %33 : vector<16xf32> to vector<16x1xf32>
    %cst_14 = arith.constant 1.000000e-07 : f32
    %35 = vector.broadcast %cst_14 : f32 to vector<16x1xf32>
    %36 = arith.addf %34, %35 : vector<16x1xf32>
    %cst_15 = arith.constant 1.000000e+00 : f32
    %37 = vector.broadcast %cst_15 : f32 to vector<16x1xf32>
    %38 = arith.divf %37, %36 : vector<16x1xf32>
    %39 = vector.broadcast %38 : vector<16x1xf32> to vector<16x32xf32>
    %40 = arith.mulf %32, %39 : vector<16x32xf32>
    %41 = vector.extract_strided_slice %6 {offsets = [0, 64], sizes = [16, 32], strides = [1, 1]} : vector<16x96xf32> to vector<16x32xf32>
    %42 = arith.mulf %40, %40 : vector<16x32xf32>
    %cst_16 = arith.constant dense<0.000000e+00> : vector<32xf32>
    %43 = vector.multi_reduction <add>, %42, %cst_16 [0] : vector<16x32xf32> to vector<32xf32>
    %44 = vector.shape_cast %43 : vector<32xf32> to vector<1x32xf32>
    %cst_17 = arith.constant 1.000000e-24 : f32
    %45 = vector.broadcast %cst_17 : f32 to vector<1x32xf32>
    %46 = arith.maximumf %44, %45 : vector<1x32xf32>
    %47 = math.rsqrt %46 : vector<1x32xf32>
    %48 = vector.broadcast %47 : vector<1x32xf32> to vector<16x32xf32>
    %49 = arith.mulf %40, %48 : vector<16x32xf32>
    %cst_18 = arith.constant dense<0.000000e+00> : vector<16x16xf32>
    %50 = tpu.matmul %24, %49, %cst_18 {dimension_numbers = #tpu.dot_dimension_numbers<[1], [1], [0], [0], [0, 0, 1, 0], [], []>} : vector<16x32xf32>, vector<16x32xf32>, vector<16x16xf32> -> vector<16x16xf32>
    %cst_19 = arith.constant dense<0.000000e+00> : vector<16x32xf32>
    %51 = tpu.matmul %50, %41, %cst_19 {dimension_numbers = #tpu.dot_dimension_numbers<[1], [0], [0], [1], [0, 0, 1, 1], [], []>} : vector<16x16xf32>, vector<16x32xf32>, vector<16x32xf32> -> vector<16x32xf32>
    %52 = arith.addf %41, %51 : vector<16x32xf32>
    %c0_20 = arith.constant 0 : index
    %c0_21 = arith.constant 0 : index
    %53 = vector.load %arg4[%c0_20, %c0_21] : memref<32x32xf32, #tpu.memory_space<vmem>>, vector<32x32xf32>
    %cst_22 = arith.constant dense<0.000000e+00> : vector<16x32xf32>
    %54 = tpu.matmul %52, %53, %cst_22 {dimension_numbers = #tpu.dot_dimension_numbers<[1], [0], [0], [1], [0, 0, 1, 1], [], []>} : vector<16x32xf32>, vector<32x32xf32>, vector<16x32xf32> -> vector<16x32xf32>
    %c0_23 = arith.constant 0 : index
    %c0_24 = arith.constant 0 : index
    %55 = vector.load %arg5[%c0_23, %c0_24] : memref<1x32xf32, #tpu.memory_space<vmem>>, vector<1x32xf32>
    %56 = vector.broadcast %55 : vector<1x32xf32> to vector<16x32xf32>
    %57 = arith.addf %54, %56 : vector<16x32xf32>
    %58 = vector.shape_cast %57 : vector<16x32xf32> to vector<1x16x32xf32>
    %c0_25 = arith.constant 0 : index
    %c0_26 = arith.constant 0 : index
    %c0_27 = arith.constant 0 : index
    %59 = vector.load %arg6[%c0_25, %c0_26, %c0_27] : memref<1x16x32xf32, #tpu.memory_space<vmem>>, vector<1x16x32xf32>
    tpu.vector_store %arg6[%c0_25, %c0_26, %c0_27], %58 {strides = array<i32>} : memref<1x16x32xf32, #tpu.memory_space<vmem>>, vector<1x16x32xf32>,
    return
  }
  func.func @transform_0(%arg0: i32) -> (i32, i32, i32) {
    %c0_i32 = arith.constant 0 : i32
    %c0_i32_0 = arith.constant 0 : i32
    %c0_i32_1 = arith.constant 0 : i32
    return %arg0, %c0_i32, %c0_i32_0 : i32, i32, i32
  }
  func.func @transform_1(%arg0: i32) -> (i32, i32) {
    %c0_i32 = arith.constant 0 : i32
    %c0_i32_0 = arith.constant 0 : i32
    %c0_i32_1 = arith.constant 0 : i32
    return %c0_i32, %c0_i32_0 : i32, i32
  }
  func.func @transform_2(%arg0: i32) -> (i32, i32) {
    %c0_i32 = arith.constant 0 : i32
    %c0_i32_0 = arith.constant 0 : i32
    %c0_i32_1 = arith.constant 0 : i32
    return %c0_i32, %c0_i32_0 : i32, i32
  }
  func.func @transform_3(%arg0: i32) -> (i32, i32) {
    %c0_i32 = arith.constant 0 : i32
    %c0_i32_0 = arith.constant 0 : i32
    %c0_i32_1 = arith.constant 0 : i32
    return %c0_i32, %c0_i32_0 : i32, i32
  }
  func.func @transform_4(%arg0: i32) -> (i32, i32) {
    %c0_i32 = arith.constant 0 : i32
    %c0_i32_0 = arith.constant 0 : i32
    %c0_i32_1 = arith.constant 0 : i32
    return %c0_i32, %c0_i32_0 : i32, i32
  }
  func.func @transform_5(%arg0: i32) -> (i32, i32, i32) {
    %c0_i32 = arith.constant 0 : i32
    %c0_i32_0 = arith.constant 0 : i32
    %c0_i32_1 = arith.constant 0 : i32
    return %arg0, %c0_i32, %c0_i32_0 : i32, i32, i32
  }
}

module attributes {stable_mosaic.version = 11 : i64} {
  func.func @essa_kernel(%arg0: i32, %arg1: memref<1x16x32xf32, #tpu.memory_space<vmem>>, %arg2: memref<32x96xf32, #tpu.memory_space<vmem>>, %arg3: memref<1x96xf32, #tpu.memory_space<vmem>>, %arg4: memref<32x32xf32, #tpu.memory_space<vmem>>, %arg5: memref<1x32xf32, #tpu.memory_space<vmem>>, %arg6: memref<1x16x32xf32, #tpu.memory_space<vmem>>, %arg7: memref<16x32xf32, #tpu.memory_space<vmem>>) attributes {dimension_semantics = [#tpu.dimension_semantics<parallel>], iteration_bounds = array<i64: 2>, scalar_prefetch = 0 : i64, scratch_operands = 1 : i64, tpu.core_type = #tpu.core_type<tc>, window_params = [{transform_indices = @transform_0, window_bounds = array<i64: 1, 16, 32>}, {pipeline_mode = #tpu.pipeline_mode<synchronous>, transform_indices = @transform_1, window_bounds = array<i64: 32, 96>}, {pipeline_mode = #tpu.pipeline_mode<synchronous>, transform_indices = @transform_2, window_bounds = array<i64: 1, 96>}, {pipeline_mode = #tpu.pipeline_mode<synchronous>, transform_indices = @transform_3, window_bounds = array<i64: 32, 32>}, {pipeline_mode = #tpu.pipeline_mode<synchronous>, transform_indices = @transform_4, window_bounds = array<i64: 1, 32>}, {transform_indices = @transform_5, window_bounds = array<i64: 1, 16, 32>}]} {
    %c0 = arith.constant 0 : index
    %c0_0 = arith.constant 0 : index
    %c0_1 = arith.constant 0 : index
    %0 = vector.load %arg1[%c0, %c0_0, %c0_1] : memref<1x16x32xf32, #tpu.memory_space<vmem>>, vector<1x16x32xf32>
    %1 = vector.shape_cast %0 : vector<1x16x32xf32> to vector<16x32xf32>
    %c0_2 = arith.constant 0 : index
    %c0_3 = arith.constant 0 : index
    %2 = vector.load %arg2[%c0_2, %c0_3] : memref<32x96xf32, #tpu.memory_space<vmem>>, vector<32x96xf32>
    %cst = arith.constant dense<0.000000e+00> : vector<16x96xf32>
    %3 = tpu.matmul %1, %2, %cst {dimension_numbers = #tpu.dot_dimension_numbers<[1], [0], [0], [1], [0, 0, 1, 1], [], []>} : vector<16x32xf32>, vector<32x96xf32>, vector<16x96xf32> -> vector<16x96xf32>
    %c0_4 = arith.constant 0 : index
    %c0_5 = arith.constant 0 : index
    %4 = vector.load %arg3[%c0_4, %c0_5] : memref<1x96xf32, #tpu.memory_space<vmem>>, vector<1x96xf32>
    %5 = vector.broadcast %4 : vector<1x96xf32> to vector<16x96xf32>
    %6 = arith.addf %3, %5 : vector<16x96xf32>
    %7 = vector.extract_strided_slice %6 {offsets = [0, 0], sizes = [16, 32], strides = [1, 1]} : vector<16x96xf32> to vector<16x32xf32>
    %cst_6 = arith.constant dense<0.000000e+00> : vector<16xf32>
    %8 = vector.multi_reduction <add>, %7, %cst_6 [1] : vector<16x32xf32> to vector<16xf32>
    %9 = vector.shape_cast %8 : vector<16xf32> to vector<16x1xf32>
    %cst_7 = arith.constant 3.200000e+01 : f32
    %10 = vector.broadcast %cst_7 : f32 to vector<16x1xf32>
    %11 = arith.divf %9, %10 : vector<16x1xf32>
    %12 = vector.broadcast %11 : vector<16x1xf32> to vector<16x32xf32>
    %13 = arith.subf %7, %12 : vector<16x32xf32>
    %14 = arith.mulf %13, %13 : vector<16x32xf32>
    %15 = arith.mulf %14, %14 : vector<16x32xf32>
    %cst_8 = arith.constant dense<0.000000e+00> : vector<16xf32>
    %16 = vector.multi_reduction <add>, %15, %cst_8 [1] : vector<16x32xf32> to vector<16xf32>
    %17 = vector.shape_cast %16 : vector<16xf32> to vector<16x1xf32>
    %cst_9 = arith.constant 1.000000e-24 : f32
    %18 = vector.broadcast %cst_9 : f32 to vector<16x1xf32>
    %19 = arith.maximumf %17, %18 : vector<16x1xf32>
    %20 = math.rsqrt %19 : vector<16x1xf32>
    %cst_10 = arith.constant 2.500000e-01 : f32
    %21 = vector.broadcast %cst_10 : f32 to vector<16x1xf32>
    %22 = arith.mulf %20, %21 : vector<16x1xf32>
    %23 = vector.broadcast %22 : vector<16x1xf32> to vector<16x32xf32>
    %24 = arith.mulf %14, %23 : vector<16x32xf32>
    %25 = vector.extract_strided_slice %6 {offsets = [0, 32], sizes = [16, 32], strides = [1, 1]} : vector<16x96xf32> to vector<16x32xf32>
    %cst_11 = arith.constant dense<0.000000e+00> : vector<16xf32>
    %26 = vector.multi_reduction <add>, %25, %cst_11 [1] : vector<16x32xf32> to vector<16xf32>
    %27 = vector.shape_cast %26 : vector<16xf32> to vector<16x1xf32>
    %cst_12 = arith.constant 3.200000e+01 : f32
    %28 = vector.broadcast %cst_12 : f32 to vector<16x1xf32>
    %29 = arith.divf %27, %28 : vector<16x1xf32>
    %30 = vector.broadcast %29 : vector<16x1xf32> to vector<16x32xf32>
    %31 = arith.subf %25, %30 : vector<16x32xf32>
    %32 = arith.mulf %31, %31 : vector<16x32xf32>
    %cst_13 = arith.constant dense<0.000000e+00> : vector<16xf32>
    %33 = vector.multi_reduction <add>, %32, %cst_13 [1] : vector<16x32xf32> to vector<16xf32>
    %34 = vector.shape_cast %33 : vector<16xf32> to vector<16x1xf32>
    %cst_14 = arith.constant 1.000000e-07 : f32
    %35 = vector.broadcast %cst_14 : f32 to vector<16x1xf32>
    %36 = arith.addf %34, %35 : vector<16x1xf32>
    %cst_15 = arith.constant 1.000000e+00 : f32
    %37 = vector.broadcast %cst_15 : f32 to vector<16x1xf32>
    %38 = arith.divf %37, %36 : vector<16x1xf32>
    %39 = vector.broadcast %38 : vector<16x1xf32> to vector<16x32xf32>
    %40 = arith.mulf %32, %39 : vector<16x32xf32>
    %41 = vector.extract_strided_slice %6 {offsets = [0, 64], sizes = [16, 32], strides = [1, 1]} : vector<16x96xf32> to vector<16x32xf32>
    %42 = arith.mulf %40, %40 : vector<16x32xf32>
    %cst_16 = arith.constant dense<0.000000e+00> : vector<32xf32>
    %43 = vector.multi_reduction <add>, %42, %cst_16 [0] : vector<16x32xf32> to vector<32xf32>
    %44 = vector.shape_cast %43 : vector<32xf32> to vector<1x32xf32>
    %cst_17 = arith.constant 1.000000e-24 : f32
    %45 = vector.broadcast %cst_17 : f32 to vector<1x32xf32>
    %46 = arith.maximumf %44, %45 : vector<1x32xf32>
    %47 = math.rsqrt %46 : vector<1x32xf32>
    %48 = vector.broadcast %47 : vector<1x32xf32> to vector<16x32xf32>
    %49 = arith.mulf %40, %48 : vector<16x32xf32>
    %cst_18 = arith.constant dense<0.000000e+00> : vector<16x16xf32>
    %50 = tpu.matmul %24, %49, %cst_18 {dimension_numbers = #tpu.dot_dimension_numbers<[1], [1], [0], [0], [0, 0, 1, 0], [], []>} : vector<16x32xf32>, vector<16x32xf32>, vector<16x16xf32> -> vector<16x16xf32>
    %cst_19 = arith.constant dense<0.000000e+00> : vector<16x32xf32>
    %51 = tpu.matmul %50, %41, %cst_19 {dimension_numbers = #tpu.dot_dimension_numbers<[1], [0], [0], [1], [0, 0, 1, 1], [], []>} : vector<16x16xf32>, vector<16x32xf32>, vector<16x32xf32> -> vector<16x32xf32>
    %52 = arith.addf %41, %51 : vector<16x32xf32>
    %c0_20 = arith.constant 0 : index
    %c0_21 = arith.constant 0 : index
    %53 = vector.load %arg4[%c0_20, %c0_21] : memref<32x32xf32, #tpu.memory_space<vmem>>, vector<32x32xf32>
    %cst_22 = arith.constant dense<0.000000e+00> : vector<16x32xf32>
    %54 = tpu.matmul %52, %53, %cst_22 {dimension_numbers = #tpu.dot_dimension_numbers<[1], [0], [0], [1], [0, 0, 1, 1], [], []>} : vector<16x32xf32>, vector<32x32xf32>, vector<16x32xf32> -> vector<16x32xf32>
    %c0_23 = arith.constant 0 : index
    %c0_24 = arith.constant 0 : index
    %55 = vector.load %arg5[%c0_23, %c0_24] : memref<1x32xf32, #tpu.memory_space<vmem>>, vector<1x32xf32>
    %56 = vector.broadcast %55 : vector<1x32xf32> to vector<16x32xf32>
    %57 = arith.addf %54, %56 : vector<16x32xf32>
    %58 = vector.shape_cast %57 : vector<16x32xf32> to vector<1x16x32xf32>
    %c0_25 = arith.constant 0 : index
    %c0_26 = arith.constant 0 : index
    %c0_27 = arith.constant 0 : index
    %59 = vector.load %arg6[%c0_25, %c0_26, %c0_27] : memref<1x16x32xf32, #tpu.memory_space<vmem>>, vector<1x16x32xf32>
    tpu.vector_store %arg6[%c0_25, %c0_26, %c0_27], %58 {strides = array<i32>} : memref<1x16x32xf32, #tpu.memory_space<vmem>>, vector<1x16x32xf32>,
    return
  }
  func.func @transform_0(%arg0: i32) -> (i32, i32, i32) {
    %c0_i32 = arith.constant 0 : i32
    %c0_i32_0 = arith.constant 0 : i32
    %c0_i32_1 = arith.constant 0 : i32
    return %arg0, %c0_i32, %c0_i32_0 : i32, i32, i32
  }
  func.func @transform_1(%arg0: i32) -> (i32, i32) {
    %c0_i32 = arith.constant 0 : i32
    %c0_i32_0 = arith.constant 0 : i32
    %c0_i32_1 = arith.constant 0 : i32
    return %c0_i32, %c0_i32_0 : i32, i32
  }
  func.func @transform_2(%arg0: i32) -> (i32, i32) {
    %c0_i32 = arith.constant 0 : i32
    %c0_i32_0 = arith.constant 0 : i32
    %c0_i32_1 = arith.constant 0 : i32
    return %c0_i32, %c0_i32_0 : i32, i32
  }
  func.func @transform_3(%arg0: i32) -> (i32, i32) {
    %c0_i32 = arith.constant 0 : i32
    %c0_i32_0 = arith.constant 0 : i32
    %c0_i32_1 = arith.constant 0 : i32
    return %c0_i32, %c0_i32_0 : i32, i32
  }
  func.func @transform_4(%arg0: i32) -> (i32, i32) {
    %c0_i32 = arith.constant 0 : i32
    %c0_i32_0 = arith.constant 0 : i32
    %c0_i32_1 = arith.constant 0 : i32
    return %c0_i32, %c0_i32_0 : i32, i32
  }
  func.func @transform_5(%arg0: i32) -> (i32, i32, i32) {
    %c0_i32 = arith.constant 0 : i32
    %c0_i32_0 = arith.constant 0 : i32
    %c0_i32_1 = arith.constant 0 : i32
    return %arg0, %c0_i32, %c0_i32_0 : i32, i32, i32
  }
}

</mosaic_0001>

<llo_original>
// kernel: tpu_custom_call.1
$region0: #{tpu_custom_call.1}
  #allocation0 [shape = 'u32[]', space=smem, size = 0x4, offset = 0x4, fixed_abs, tag = 'smem constant byte address 0x4 - core index']
  #allocation1 [shape = 'u32[144,128]{1,0:T(1,128)}', space=vmem, size = 0x12000, scoped, tag = 'internal scratch']
  #allocation2 [shape = 'f32[16,32]{1,0:T(8,128)}', space=vmem, size = 0x2000, scoped, tag = 'scratch operand']
  %s0 = inlined_call_operand.hbm [shape: f32[2,16,32], index: 0, kind: input, shape index: {}]
  %s1 = inlined_call_operand.hbm [shape: f32[32,96], index: 1, kind: input, shape index: {}]
  %s2 = inlined_call_operand.vmem [shape: f32[1,96], index: 2, kind: input, shape index: {}]
  %s3 = inlined_call_operand.hbm [shape: f32[32,32], index: 3, kind: input, shape index: {}]
  %s4 = inlined_call_operand.vmem [shape: f32[1,32], index: 4, kind: input, shape index: {}]
  %s5 = inlined_call_operand.hbm [shape: f32[2,16,32], index: 5, kind: output, shape index: {}]
  %s6 = sld [smem:[#allocation0]]
  $region65: #{tpu_custom_call.1} parent=0
    _
  %s8 = ssub.s32 1, %s6
  %s9 = scalar_select 0, %s8, %s6
  $region1: #{tpu_custom_call.1} parent=0
    #allocation3 [shape = 'u8[16384]{0}', space=vmem, size = 0x4000, scoped, tag = 'input window, operand 0']
    #allocation4 [shape = 's32[2]{0}', space=sflag, size = 0x8, scoped, tag = 'scoped memory for tpu_custom_call.1']
    #allocation5 [shape = 's32[2]{0}', space=sflag, size = 0x8, scoped, tag = 'scoped memory for tpu_custom_call.1']
    #allocation6 [shape = 'u8[16384]{0}', space=vmem, size = 0x4000, scoped, tag = 'input window, operand 1, single buffered']
    #allocation7 [shape = 's32[1]{0}', space=sflag, size = 0x4, scoped, tag = 'scoped memory for tpu_custom_call.1']
    #allocation8 [shape = 'u8[16384]{0}', space=vmem, size = 0x4000, scoped, tag = 'input window, operand 3, single buffered']
    #allocation9 [shape = 'u8[16384]{0}', space=vmem, size = 0x4000, scoped, tag = 'output window, operand 0']
    %10 = vsyncpa [#allocation4], 0
    %s11 = scalar_lea.sflag [#allocation4], 1
    %12 = vsyncpa %s11, 0
    %13 = vsyncpa [#allocation7], 0
    %14 = vsyncpa [#allocation5], 0
    %s15 = scalar_lea.sflag [#allocation5], 1
    %16 = vsyncpa %s15, 0
    loop: start=0, step=1, limit=4
    $region2: #{tpu_custom_call.1} parent=1 // loop_pre_header
      _
    $region3: #{tpu_custom_call.1} parent=1 // loop_header
      %s18 = sphi 0, %s22
      %p19 = scmp.ge.s32.totalorder %s18, 4
      %s28 = sphi 0, %s30
      %s31 = sphi 0, %s28
      %s32 = sphi 0, %s31
      %s48 = sphi 0, %s32
      %s52 = sphi 0, %s52
      %s54 = sphi 0, %s52
      %s55 = sphi 0, %s54
      %s69 = sphi 0, %s55
      %s73 = sphi 0, %s73
      %s75 = sphi 0, %s73
      %s76 = sphi 0, %s75
      %s90 = sphi 0, %s76
      %s94 = sphi 0, %s94
      %s96 = sphi 0, %s94
      %s97 = sphi 0, %s96
      %s111 = sphi 0, %s97
      %s115 = sphi 0, %s115
      %s117 = sphi 0, %s115
      %s118 = sphi 0, %s117
      %s132 = sphi 0, %s118
      %s138 = sphi 0, %s140
      %s141 = sphi 0, %s138
      %s142 = sphi 0, %s141
      %s158 = sphi 0, %s142
    $region4: #{tpu_custom_call.1} parent=1 // loop_header_branch
      %21 = sbr.rel (%p19) target = $region8
    $region5: #{tpu_custom_call.1} parent=1 // loop_body
      %s23 = ssub.s32 %s18, 1
      %s24 = ssub.s32 %s18, 2
      %s25 = sadd.s32 %s18, 1
      %s26 = ssub.s32 %s18, %s25
      %p27 = scmp.eq.s32.totalorder %s26, 0
      %s29 = sadd.s32 %s28, 1
      %s30 = scalar_select %p27, %s28, %s29
      %p33 = pneg %p27
      %p34 = scmp.eq.s32.totalorder %s18, 1
      %p35 = por %p33, %p34
      %p36 = scmp.ne.s32.totalorder %s28, %s31
      %p37 = scmp.eq.s32.totalorder %s18, 0
      %p38 = por %p36, %p37
      %p39 = scmp.ne.s32.totalorder %s28, %s31
      %p40 = scmp.eq.s32.totalorder %s23, 1
      %p41 = por %p39, %p40
      %p42 = scmp.ne.s32.totalorder %s31, %s32
      %p43 = scmp.eq.s32.totalorder %s23, 0
      %p44 = por %p42, %p43
      %p45 = scmp.ne.s32.totalorder %s31, %s32
      %p46 = scmp.eq.s32.totalorder %s24, 1
      %p47 = por %p45, %p46
      %p49 = scmp.ne.s32.totalorder %s32, %s48
      %p50 = scmp.eq.s32.totalorder %s24, 0
      %p51 = por %p49, %p50
      %s53 = sadd.s32 %s52, 1
      %p56 = scmp.eq.s32.totalorder %s18, 1
      %p57 = scmp.ne.s32.totalorder %s52, %s54
      %p58 = scmp.eq.s32.totalorder %s18, 0
      %p59 = por %p57, %p58
      %p60 = scmp.ne.s32.totalorder %s52, %s54
      %p61 = scmp.eq.s32.totalorder %s23, 1
      %p62 = por %p60, %p61
      %p63 = scmp.ne.s32.totalorder %s54, %s55
      %p64 = scmp.eq.s32.totalorder %s23, 0
      %p65 = por %p63, %p64
      %p66 = scmp.ne.s32.totalorder %s54, %s55
      %p67 = scmp.eq.s32.totalorder %s24, 1
      %p68 = por %p66, %p67
      %p70 = scmp.ne.s32.totalorder %s55, %s69
      %p71 = scmp.eq.s32.totalorder %s24, 0
      %p72 = por %p70, %p71
      %s74 = sadd.s32 %s73, 1
      %p77 = scmp.eq.s32.totalorder %s18, 1
      %p78 = scmp.ne.s32.totalorder %s73, %s75
      %p79 = scmp.eq.s32.totalorder %s18, 0
      %p80 = por %p78, %p79
      %p81 = scmp.ne.s32.totalorder %s73, %s75
      %p82 = scmp.eq.s32.totalorder %s23, 1
      %p83 = por %p81, %p82
      %p84 = scmp.ne.s32.totalorder %s75, %s76
      %p85 = scmp.eq.s32.totalorder %s23, 0
      %p86 = por %p84, %p85
      %p87 = scmp.ne.s32.totalorder %s75, %s76
      %p88 = scmp.eq.s32.totalorder %s24, 1
      %p89 = por %p87, %p88
      %p91 = scmp.ne.s32.totalorder %s76, %s90
      %p92 = scmp.eq.s32.totalorder %s24, 0
      %p93 = por %p91, %p92
      %s95 = sadd.s32 %s94, 1
      %p98 = scmp.eq.s32.totalorder %s18, 1
      %p99 = scmp.ne.s32.totalorder %s94, %s96
      %p100 = scmp.eq.s32.totalorder %s18, 0
      %p101 = por %p99, %p100
      %p102 = scmp.ne.s32.totalorder %s94, %s96
      %p103 = scmp.eq.s32.totalorder %s23, 1
      %p104 = por %p102, %p103
      %p105 = scmp.ne.s32.totalorder %s96, %s97
      %p106 = scmp.eq.s32.totalorder %s23, 0
      %p107 = por %p105, %p106
      %p108 = scmp.ne.s32.totalorder %s96, %s97
      %p109 = scmp.eq.s32.totalorder %s24, 1
      %p110 = por %p108, %p109
      %p112 = scmp.ne.s32.totalorder %s97, %s111
      %p113 = scmp.eq.s32.totalorder %s24, 0
      %p114 = por %p112, %p113
      %s116 = sadd.s32 %s115, 1
      %p119 = scmp.eq.s32.totalorder %s18, 1
      %p120 = scmp.ne.s32.totalorder %s115, %s117
      %p121 = scmp.eq.s32.totalorder %s18, 0
      %p122 = por %p120, %p121
      %p123 = scmp.ne.s32.totalorder %s115, %s117
      %p124 = scmp.eq.s32.totalorder %s23, 1
      %p125 = por %p123, %p124
      %p126 = scmp.ne.s32.totalorder %s117, %s118
      %p127 = scmp.eq.s32.totalorder %s23, 0
      %p128 = por %p126, %p127
      %p129 = scmp.ne.s32.totalorder %s117, %s118
      %p130 = scmp.eq.s32.totalorder %s24, 1
      %p131 = por %p129, %p130
      %p133 = scmp.ne.s32.totalorder %s118, %s132
      %p134 = scmp.eq.s32.totalorder %s24, 0
      %p135 = por %p133, %p134
      %s136 = ssub.s32 %s18, %s25
      %p137 = scmp.eq.s32.totalorder %s136, 0
      %s139 = sadd.s32 %s138, 1
      %s140 = scalar_select %p137, %s138, %s139
      %p143 = pneg %p137
      %p144 = scmp.eq.s32.totalorder %s18, 1
      %p145 = por %p143, %p144
      %p146 = scmp.ne.s32.totalorder %s138, %s141
      %p147 = scmp.eq.s32.totalorder %s18, 0
      %p148 = por %p146, %p147
      %p149 = scmp.ne.s32.totalorder %s138, %s141
      %p150 = scmp.eq.s32.totalorder %s23, 1
      %p151 = por %p149, %p150
      %p152 = scmp.ne.s32.totalorder %s141, %s142
      %p153 = scmp.eq.s32.totalorder %s23, 0
      %p154 = por %p152, %p153
      %p155 = scmp.ne.s32.totalorder %s141, %s142
      %p156 = scmp.eq.s32.totalorder %s24, 1
      %p157 = por %p155, %p156
      %p159 = scmp.ne.s32.totalorder %s142, %s158
      %p160 = scmp.eq.s32.totalorder %s24, 0
      %p161 = por %p159, %p160
      %p162 = scmp.le.s32.totalorder 1, %s18
      %p163 = scmp.lt.s32.totalorder %s18, 3
      %p164 = pnand %p162, %p163
      %p165 = pneg %p164
      // Predicated region
      $region9: #{tpu_custom_call.1} parent=5 // pred_check
        _
      $region10: #{tpu_custom_call.1} parent=5 // pred_check_branch
        %167 = sbr.rel (%p164) target = $region12
      $region11: #{tpu_custom_call.1} parent=5 // pred_region
        %s168 = ssub.s32 %s18, 1
        // Predicated region
        $region13: #{tpu_custom_call.1} parent=11 // pred_check
          %p169 = pneg %p65
        $region14: #{tpu_custom_call.1} parent=11 // pred_check_branch
          %171 = sbr.rel (%p169) target = $region16
        $region15: #{tpu_custom_call.1} parent=11 // pred_region
          %s173 = ssub.s32 512, 512
          %174 = vsyncadd [#allocation7], %s173
          %s175 = sshll.u32 [#allocation6], 4
          %s176 = int_to_ptr.vmem [resolvable:$true] %s175
          %181 = dma.hbm_to_vmem [thread:$0]  %s1, 512, %s176, [#allocation7], 128, 128, 8
        $region16: #{tpu_custom_call.1} parent=11 // pred_fallthru
          _
        // Predicated region
        $region17: #{tpu_custom_call.1} parent=11 // pred_check
          %p182 = pneg %p86
        $region18: #{tpu_custom_call.1} parent=11 // pred_check_branch
          %184 = sbr.rel (%p182) target = $region20
        $region19: #{tpu_custom_call.1} parent=11 // pred_region
          _
        $region20: #{tpu_custom_call.1} parent=11 // pred_fallthru
          _
        // Predicated region
        $region21: #{tpu_custom_call.1} parent=11 // pred_check
          %p185 = pneg %p107
        $region22: #{tpu_custom_call.1} parent=11 // pred_check_branch
          %187 = sbr.rel (%p185) target = $region24
        $region23: #{tpu_custom_call.1} parent=11 // pred_region
          %s189 = ssub.s32 512, 512
          %190 = vsyncadd [#allocation7], %s189
          %s191 = sshll.u32 [#allocation8], 4
          %s192 = int_to_ptr.vmem [resolvable:$true] %s191
          %197 = dma.hbm_to_vmem [thread:$0]  %s3, 512, %s192, [#allocation7], 128, 128, 8
        $region24: #{tpu_custom_call.1} parent=11 // pred_fallthru
          _
        // Predicated region
        $region25: #{tpu_custom_call.1} parent=11 // pred_check
          %p198 = pneg %p128
        $region26: #{tpu_custom_call.1} parent=11 // pred_check_branch
          %200 = sbr.rel (%p198) target = $region28
        $region27: #{tpu_custom_call.1} parent=11 // pred_region
          _
        $region28: #{tpu_custom_call.1} parent=11 // pred_fallthru
          _
      $region12: #{tpu_custom_call.1} parent=5 // pred_fallthru
        _
      %p201 = scmp.lt.s32.totalorder %s18, 2
      // Predicated region
      $region29: #{tpu_custom_call.1} parent=5 // pred_check
        %p202 = pneg %p201
      $region30: #{tpu_custom_call.1} parent=5 // pred_check_branch
        %204 = sbr.rel (%p202) target = $region32
      $region31: #{tpu_custom_call.1} parent=5 // pred_region
        // Predicated region
        $region33: #{tpu_custom_call.1} parent=31 // pred_check
          %p205 = pneg %p38
        $region34: #{tpu_custom_call.1} parent=31 // pred_check_branch
          %207 = sbr.rel (%p205) target = $region36
        $region35: #{tpu_custom_call.1} parent=31 // pred_region
          %s208 = sand.u32 %s28, 1
          %s209 = scalar_lea.sflag [#allocation4], %s208
          %s210 = sand.u32 %s28, 1
          %s211 = smul.addr %s210, 16
          %s212 = scalar_lea.vmem [#allocation3], %s211
          %s214 = ssub.s32 256, 256
          %215 = vsyncadd %s209, %s214
          %s216 = smul.addr %s18, 2
          %s217 = smul.addr %s216, 128
          %s218 = scalar_lea.hbm %s0, %s217
          %s219 = sshll.u32 %s212, 4
          %s220 = int_to_ptr.vmem [resolvable:$true] %s219
          %225 = dma.hbm_to_vmem [thread:$0]  %s218, 256, %s220, %s209, 128, 128, 8
        $region36: #{tpu_custom_call.1} parent=31 // pred_fallthru
          _
      $region32: #{tpu_custom_call.1} parent=5 // pred_fallthru
        _
      %p226 = scmp.le.s32.totalorder 1, %s18
      %p227 = scmp.lt.s32.totalorder %s18, 3
      %p228 = pnand %p226, %p227
      %p229 = pneg %p228
      // Predicated region
      $region37: #{tpu_custom_call.1} parent=5 // pred_check
        _
      $region38: #{tpu_custom_call.1} parent=5 // pred_check_branch
        %231 = sbr.rel (%p228) target = $region40
      $region39: #{tpu_custom_call.1} parent=5 // pred_region
        %s232 = ssub.s32 %s18, 1
        %s233 = sand.u32 %s31, 1
        %s234 = scalar_lea.sflag [#allocation4], %s233
        %s235 = sand.u32 %s31, 1
        %s236 = smul.addr %s235, 16
        %s237 = scalar_lea.vmem [#allocation3], %s236
        // Predicated region
        $region41: #{tpu_custom_call.1} parent=39 // pred_check
          %p238 = pneg %p44
        $region42: #{tpu_custom_call.1} parent=39 // pred_check_branch
          %240 = sbr.rel (%p238) target = $region44
        $region43: #{tpu_custom_call.1} parent=39 // pred_region
          %241 = dma.done %s234, 256
        $region44: #{tpu_custom_call.1} parent=39 // pred_fallthru
          _
        // Predicated region
        $region45: #{tpu_custom_call.1} parent=39 // pred_check
          %p242 = pneg %p65
        $region46: #{tpu_custom_call.1} parent=39 // pred_check_branch
          %244 = sbr.rel (%p242) target = $region48
        $region47: #{tpu_custom_call.1} parent=39 // pred_region
          %245 = dma.done [#allocation7], 512
        $region48: #{tpu_custom_call.1} parent=39 // pred_fallthru
          _
        // Predicated region
        $region49: #{tpu_custom_call.1} parent=39 // pred_check
          %p246 = pneg %p107
        $region50: #{tpu_custom_call.1} parent=39 // pred_check_branch
          %248 = sbr.rel (%p246) target = $region52
        $region51: #{tpu_custom_call.1} parent=39 // pred_region
          %249 = dma.done [#allocation7], 512
        $region52: #{tpu_custom_call.1} parent=39 // pred_fallthru
          _
        %s250 = sand.u32 %s31, 1
        %s251 = scalar_lea.sflag [#allocation4], %s250
        %s252 = sand.u32 %s31, 1
        %s253 = smul.addr %s252, 16
        %s254 = scalar_lea.vmem [#allocation3], %s253
        %p255 = pneg %p44
        %p256 = pneg %p41
        %p257 = pneg %p65
        %p258 = pneg %p62
        %p259 = pneg %p86
        %p260 = pneg %p83
        %p261 = pneg %p107
        %p262 = pneg %p104
        %p263 = pneg %p128
        %p264 = pneg %p125
        %p265 = pneg %p154
        %p266 = pneg %p151
        %s267 = sand.u32 %s141, 1
        %s268 = scalar_lea.sflag [#allocation5], %s267
        %s269 = sand.u32 %s141, 1
        %s270 = smul.addr %s269, 16
        %s271 = scalar_lea.vmem [#allocation9], %s270
        %v272 = vld [vmem:[%s237] sm:$0xff]
        %v273 = vld [vmem:[%s237 + $0x8] sm:$0xff]
        %v274 = vld [vmem:[#allocation6] sm:$0xff]
        %v275 = vld [vmem:[#allocation6 + $0x8] sm:$0xff]
        %v276 = vld [vmem:[#allocation6 + $0x10] sm:$0xff]
        %v277 = vld [vmem:[#allocation6 + $0x18] sm:$0xff]
        %v278 = vld [vmem:[%s2] sm:$0x1]
        %v280 = vlaneseq
        %v281 = vshrl.u32 %v280, 7
        %v282 = vsub.s32 0, %v281
        %v283 = vrot.slane %v278, %v282
        %vm285 = vcmask 261120
        %v287 = vsel %vm285, %v272, 0
        %v290 = vsel %vm285, %v273, 0
        %292 = vmatprep.subr.mxu0 0.0
        %293 = vmatpush1.msra.mxu0 %v274
        %294 = vmatprep.subr.mxu0 0.0
        %295 = vmatpush1.msra.mxu0 %v275
        %296 = vmatprep.subr.mxu0 0.0
        %297 = vmatpush1.msra.mxu0 %v276
        %298 = vmatprep.subr.mxu0 0.0
        %299 = vmatpush1.msra.mxu0 %v277
        %300 = vmatprep.subr.mxu0 0.0
        %301 = vmatpush1.msra.mxu0 0.0
        %302 = vmatprep.subr.mxu0 0.0
        %303 = vmatpush1.msra.mxu0 0.0
        %304 = vmatprep.subr.mxu0 0.0
        %305 = vmatpush1.msra.mxu0 0.0
        %306 = vmatprep.subr.mxu0 0.0
        %307 = vmatpush1.msra.mxu0 0.0
        %308 = vmatprep.subr.mxu0 0.0
        %309 = vmatpush1.msra.mxu0 0.0
        %310 = vmatprep.subr.mxu0 0.0
        %311 = vmatpush1.msra.mxu0 0.0
        %312 = vmatprep.subr.mxu0 0.0
        %313 = vmatpush1.msra.mxu0 0.0
        %314 = vmatprep.subr.mxu0 0.0
        %315 = vmatpush1.msra.mxu0 0.0
        %316 = vmatprep.subr.mxu0 0.0
        %317 = vmatpush1.msra.mxu0 0.0
        %318 = vmatprep.subr.mxu0 0.0
        %319 = vmatpush1.msra.mxu0 0.0
        %320 = vmatprep.subr.mxu0 0.0
        %321 = vmatpush1.msra.mxu0 0.0
        %322 = vmatprep.subr.mxu0 0.0
        %323 = vmatpush1.msra.mxu0 0.0
        %324 = vmatprep.subr.mxu0 0.0
        %325 = vmatpush1.msra.mxu0 0.0
        %326 = vmatprep.subr.mxu0 0.0
        %327 = vmatpush1.msra.mxu0 0.0
        %328 = vmatprep.subr.mxu0 0.0
        %329 = vmatpush1.msra.mxu0 0.0
        %330 = vmatprep.subr.mxu0 0.0
        %331 = vmatpush1.msra.mxu0 0.0
        %332 = vmatprep.subr.mxu0 0.0
        %333 = vmatpush1.msra.mxu0 0.0
        %334 = vmatprep.subr.mxu0 0.0
        %335 = vmatpush1.msra.mxu0 0.0
        %336 = vmatprep.subr.mxu0 0.0
        %337 = vmatpush1.msra.mxu0 0.0
        %338 = vmatprep.subr.mxu0 0.0
        %339 = vmatpush1.msra.mxu0 0.0
        %340 = vmatprep.subr.mxu0 0.0
        %341 = vmatpush1.msra.mxu0 0.0
        %342 = vmatprep.subr.mxu0 0.0
        %343 = vmatpush1.msra.mxu0 0.0
        %344 = vmatprep.subr.mxu0 0.0
        %345 = vmatpush1.msra.mxu0 0.0
        %346 = vmatprep.subr.mxu0 0.0
        %347 = vmatpush1.msra.mxu0 0.0
        %348 = vmatprep.subr.mxu0 0.0
        %349 = vmatpush1.msra.mxu0 0.0
        %350 = vmatprep.subr.mxu0 0.0
        %351 = vmatpush1.msra.mxu0 0.0
        %352 = vmatprep.subr.mxu0 0.0
        %353 = vmatpush1.msra.mxu0 0.0
        %354 = vmatprep.subr.mxu0 0.0
        %355 = vmatpush1.msra.mxu0 0.0
        %356 = vmatprep.mubr.f32.mxu0 0.0
        %357 = vmatmul.mubr.f32.gmra.mrb[0].mxu0 %v287
        %v358 = vpop.f32.mrb[0].mxu0
        %v359 = vadd.f32 %v283, %v358
        %v360 = vpop.f32.mrb[0].mxu0
        %361 = vmatprep.mubr.f32.mxu0 0.0
        %362 = vmatmul.mubr.f32.gmra.mrb[0].mxu0 %v290
        %v363 = vpop.f32.mrb[0].mxu0
        %v364 = vadd.f32 %v283, %v363
        %v365 = vpop.f32.mrb[0].mxu0
        %366 = vdwg.mxu0
        %v367 = vsel %vm285, %v359, 0.0
        %368 = vadd.xlane.f32.xlu0 %v367
        %v369 = vpop.xlane.xlu0 %368
        %v370 = vsel %vm285, %v364, 0.0
        %371 = vadd.xlane.f32.xlu0 %v370
        %v372 = vpop.xlane.xlu0 %371
        %v373 = vrcp.pop 32.0
        %v374 = vmul.f32 %v369, %v373
        %v375 = vmul.f32 %v372, %v373
        %v376 = vsub.f32 %v359, %v374
        %v377 = vsub.f32 %v364, %v375
        %v378 = vmul.f32 %v376, %v376
        %v379 = vmul.f32 %v377, %v377
        %v380 = vmul.f32 %v378, %v378
        %v381 = vmul.f32 %v379, %v379
        %v382 = vsel %vm285, %v380, 0.0
        %383 = vadd.xlane.f32.xlu0 %v382
        %v384 = vpop.xlane.xlu0 %383
        %v385 = vsel %vm285, %v381, 0.0
        %386 = vadd.xlane.f32.xlu0 %v385
        %v387 = vpop.xlane.xlu0 %386
        %v388 = vmax.f32 %v384, 1e-24
        %v389 = vmax.f32 %v387, 1e-24
        %v390 = vrsqrt.pop %v388
        %v391 = vrsqrt.pop %v389
        %v392 = vmul.f32 %v390, 0.25
        %v393 = vmul.f32 %v391, 0.25
        %v394 = vmul.f32 %v378, %v392
        %v395 = vmul.f32 %v379, %v393
        %398 = vrot.lane.b32.xlu0 %v359, 96
        %v399 = vpop.permute.xlu0 %398
        %400 = vrot.lane.b32.xlu0 %v364, 96
        %v401 = vpop.permute.xlu0 %400
        %v404 = vsel %vm285, %v399, 0.0
        %405 = vadd.xlane.f32.xlu0 %v404
        %v406 = vpop.xlane.xlu0 %405
        %v407 = vsel %vm285, %v401, 0.0
        %408 = vadd.xlane.f32.xlu0 %v407
        %v409 = vpop.xlane.xlu0 %408
        %v410 = vmul.f32 %v406, %v373
        %v411 = vmul.f32 %v409, %v373
        %v412 = vsub.f32 %v359, %v410
        %v413 = vsub.f32 %v364, %v411
        %v414 = vmul.f32 %v412, %v412
        %v415 = vmul.f32 %v413, %v413
        %418 = vrot.lane.b32.xlu0 %v414, 96
        %v419 = vpop.permute.xlu0 %418
        %420 = vrot.lane.b32.xlu0 %v415, 96
        %v421 = vpop.permute.xlu0 %420
        %v424 = vsel %vm285, %v419, 0.0
        %425 = vadd.xlane.f32.xlu0 %v424
        %v426 = vpop.xlane.xlu0 %425
        %v427 = vsel %vm285, %v421, 0.0
        %428 = vadd.xlane.f32.xlu0 %v427
        %v429 = vpop.xlane.xlu0 %428
        %v430 = vadd.f32 %v426, 1e-07
        %v431 = vadd.f32 %v429, 1e-07
        %v432 = vrcp.pop %v430
        %v433 = vmul.f32 1.0, %v432
        %v434 = vrcp.pop %v431
        %v435 = vmul.f32 1.0, %v434
        %v436 = vmul.f32 %v414, %v433
        %v437 = vmul.f32 %v415, %v435
        %v438 = vmul.f32 %v436, %v436
        %v439 = vmul.f32 %v437, %v437
        %vm440 = vcmask 523520
        %v441 = vsel %vm440, %v438, 0.0
        %v442 = vsel %vm440, %v439, 0.0
        %v443 = vadd.f32 %v441, %v442
        %v444 = vrot.slane %v443, 4
        %v445 = vadd.f32 %v443, %v444
        %v446 = vrot.slane %v445, 2
        %v447 = vadd.f32 %v445, %v446
        %v448 = vrot.slane %v447, 1
        %v449 = vadd.f32 %v447, %v448
        %v450 = vmax.f32 %v449, 1e-24
        %v451 = vrsqrt.pop %v450
        %v452 = vmul.f32 %v436, %v451
        %v453 = vmul.f32 %v437, %v451
        %456 = vrot.lane.b32.xlu0 %v452, 96
        %v457 = vpop.permute.xlu0 %456
        %458 = vrot.lane.b32.xlu0 %v453, 96
        %v459 = vpop.permute.xlu0 %458
        %v461 = vsel %vm285, %v394, 0
        %v464 = vsel %vm285, %v395, 0
        %v466 = vsel %vm285, %v457, 0
        %v468 = vsel %vm285, %v459, 0
        %470 = vmatprep.subr.mxu0 0.0
        %471 = vmatpush1.xpose.msra.mxu0 %v466
        %472 = vmatprep.subr.mxu0 0.0
        %473 = vmatpush1.xpose.msra.mxu0 %v468
        %474 = vmatprep.subr.mxu0 0.0
        %475 = vmatpush1.xpose.msra.mxu0 0.0
        %476 = vmatprep.subr.mxu0 0.0
        %477 = vmatpush1.xpose.msra.mxu0 0.0
        %478 = vmatprep.subr.mxu0 0.0
        %479 = vmatpush1.xpose.msra.mxu0 0.0
        %480 = vmatprep.subr.mxu0 0.0
        %481 = vmatpush1.xpose.msra.mxu0 0.0
        %482 = vmatprep.subr.mxu0 0.0
        %483 = vmatpush1.xpose.msra.mxu0 0.0
        %484 = vmatprep.subr.mxu0 0.0
        %485 = vmatpush1.xpose.msra.mxu0 0.0
        %486 = vmatprep.subr.mxu0 0.0
        %487 = vmatpush1.xpose.msra.mxu0 0.0
        %488 = vmatprep.subr.mxu0 0.0
        %489 = vmatpush1.xpose.msra.mxu0 0.0
        %490 = vmatprep.subr.mxu0 0.0
        %491 = vmatpush1.xpose.msra.mxu0 0.0
        %492 = vmatprep.subr.mxu0 0.0
        %493 = vmatpush1.xpose.msra.mxu0 0.0
        %494 = vmatprep.subr.mxu0 0.0
        %495 = vmatpush1.xpose.msra.mxu0 0.0
        %496 = vmatprep.subr.mxu0 0.0
        %497 = vmatpush1.xpose.msra.mxu0 0.0
        %498 = vmatprep.subr.mxu0 0.0
        %499 = vmatpush1.xpose.msra.mxu0 0.0
        %500 = vmatprep.subr.mxu0 0.0
        %501 = vmatpush1.xpose.msra.mxu0 0.0
        %502 = vmatprep.subr.mxu0 0.0
        %503 = vmatpush1.xpose.msra.mxu0 0.0
        %504 = vmatprep.subr.mxu0 0.0
        %505 = vmatpush1.xpose.msra.mxu0 0.0
        %506 = vmatprep.subr.mxu0 0.0
        %507 = vmatpush1.xpose.msra.mxu0 0.0
        %508 = vmatprep.subr.mxu0 0.0
        %509 = vmatpush1.xpose.msra.mxu0 0.0
        %510 = vmatprep.subr.mxu0 0.0
        %511 = vmatpush1.xpose.msra.mxu0 0.0
        %512 = vmatprep.subr.mxu0 0.0
        %513 = vmatpush1.xpose.msra.mxu0 0.0
        %514 = vmatprep.subr.mxu0 0.0
        %515 = vmatpush1.xpose.msra.mxu0 0.0
        %516 = vmatprep.subr.mxu0 0.0
        %517 = vmatpush1.xpose.msra.mxu0 0.0
        %518 = vmatprep.subr.mxu0 0.0
        %519 = vmatpush1.xpose.msra.mxu0 0.0
        %520 = vmatprep.subr.mxu0 0.0
        %521 = vmatpush1.xpose.msra.mxu0 0.0
        %522 = vmatprep.subr.mxu0 0.0
        %523 = vmatpush1.xpose.msra.mxu0 0.0
        %524 = vmatprep.subr.mxu0 0.0
        %525 = vmatpush1.xpose.msra.mxu0 0.0
        %526 = vmatprep.subr.mxu0 0.0
        %527 = vmatpush1.xpose.msra.mxu0 0.0
        %528 = vmatprep.subr.mxu0 0.0
        %529 = vmatpush1.xpose.msra.mxu0 0.0
        %530 = vmatprep.subr.mxu0 0.0
        %531 = vmatpush1.xpose.msra.mxu0 0.0
        %532 = vmatprep.subr.mxu0 0.0
        %533 = vmatpush1.xpose.msra.mxu0 0.0
        %534 = vmatprep.mubr.f32.mxu0 0.0
        %535 = vmatmul.mubr.f32.gmra.mrb[0].mxu0 %v461
        %v536 = vpop.f32.mrb[0].mxu0
        %v537 = vadd.f32 0.0, %v536
        %v538 = vpop.f32.mrb[0].mxu0
        %539 = vmatprep.mubr.f32.mxu0 0.0
        %540 = vmatmul.mubr.f32.gmra.mrb[0].mxu0 %v464
        %v541 = vpop.f32.mrb[0].mxu0
        %v542 = vadd.f32 0.0, %v541
        %v543 = vpop.f32.mrb[0].mxu0
        %544 = vdwg.mxu0
        %545 = vrot.lane.b32.xlu0 %v359, 64
        %v546 = vpop.permute.xlu0 %545
        %547 = vrot.lane.b32.xlu0 %v364, 64
        %v548 = vpop.permute.xlu0 %547
        %vm551 = vcmask 130048
        %v553 = vsel %vm551, %v537, 0
        %v556 = vsel %vm551, %v542, 0
        %558 = vmatprep.subr.mxu0 0.0
        %559 = vmatpush1.msra.mxu0 %v546
        %560 = vmatprep.subr.mxu0 0.0
        %561 = vmatpush1.msra.mxu0 %v548
        %562 = vmatprep.subr.mxu0 0.0
        %563 = vmatpush1.msra.mxu0 0.0
        %564 = vmatprep.subr.mxu0 0.0
        %565 = vmatpush1.msra.mxu0 0.0
        %566 = vmatprep.subr.mxu0 0.0
        %567 = vmatpush1.msra.mxu0 0.0
        %568 = vmatprep.subr.mxu0 0.0
        %569 = vmatpush1.msra.mxu0 0.0
        %570 = vmatprep.subr.mxu0 0.0
        %571 = vmatpush1.msra.mxu0 0.0
        %572 = vmatprep.subr.mxu0 0.0
        %573 = vmatpush1.msra.mxu0 0.0
        %574 = vmatprep.subr.mxu0 0.0
        %575 = vmatpush1.msra.mxu0 0.0
        %576 = vmatprep.subr.mxu0 0.0
        %577 = vmatpush1.msra.mxu0 0.0
        %578 = vmatprep.subr.mxu0 0.0
        %579 = vmatpush1.msra.mxu0 0.0
        %580 = vmatprep.subr.mxu0 0.0
        %581 = vmatpush1.msra.mxu0 0.0
        %582 = vmatprep.subr.mxu0 0.0
        %583 = vmatpush1.msra.mxu0 0.0
        %584 = vmatprep.subr.mxu0 0.0
        %585 = vmatpush1.msra.mxu0 0.0
        %586 = vmatprep.subr.mxu0 0.0
        %587 = vmatpush1.msra.mxu0 0.0
        %588 = vmatprep.subr.mxu0 0.0
        %589 = vmatpush1.msra.mxu0 0.0
        %590 = vmatprep.subr.mxu0 0.0
        %591 = vmatpush1.msra.mxu0 0.0
        %592 = vmatprep.subr.mxu0 0.0
        %593 = vmatpush1.msra.mxu0 0.0
        %594 = vmatprep.subr.mxu0 0.0
        %595 = vmatpush1.msra.mxu0 0.0
        %596 = vmatprep.subr.mxu0 0.0
        %597 = vmatpush1.msra.mxu0 0.0
        %598 = vmatprep.subr.mxu0 0.0
        %599 = vmatpush1.msra.mxu0 0.0
        %600 = vmatprep.subr.mxu0 0.0
        %601 = vmatpush1.msra.mxu0 0.0
        %602 = vmatprep.subr.mxu0 0.0
        %603 = vmatpush1.msra.mxu0 0.0
        %604 = vmatprep.subr.mxu0 0.0
        %605 = vmatpush1.msra.mxu0 0.0
        %606 = vmatprep.subr.mxu0 0.0
        %607 = vmatpush1.msra.mxu0 0.0
        %608 = vmatprep.subr.mxu0 0.0
        %609 = vmatpush1.msra.mxu0 0.0
        %610 = vmatprep.subr.mxu0 0.0
        %611 = vmatpush1.msra.mxu0 0.0
        %612 = vmatprep.subr.mxu0 0.0
        %613 = vmatpush1.msra.mxu0 0.0
        %614 = vmatprep.subr.mxu0 0.0
        %615 = vmatpush1.msra.mxu0 0.0
        %616 = vmatprep.subr.mxu0 0.0
        %617 = vmatpush1.msra.mxu0 0.0
        %618 = vmatprep.subr.mxu0 0.0
        %619 = vmatpush1.msra.mxu0 0.0
        %620 = vmatprep.subr.mxu0 0.0
        %621 = vmatpush1.msra.mxu0 0.0
        %622 = vmatprep.mubr.f32.mxu0 0.0
        %623 = vmatmul.mubr.f32.gmra.mrb[0].mxu0 %v553
        %v624 = vpop.f32.mrb[0].mxu0
        %v625 = vadd.f32 0.0, %v624
        %v626 = vpop.f32.mrb[0].mxu0
        %627 = vmatprep.mubr.f32.mxu0 0.0
        %628 = vmatmul.mubr.f32.gmra.mrb[0].mxu0 %v556
        %v629 = vpop.f32.mrb[0].mxu0
        %v630 = vadd.f32 0.0, %v629
        %v631 = vpop.f32.mrb[0].mxu0
        %632 = vdwg.mxu0
        %635 = vrot.lane.b32.xlu0 %v625, 64
        %v636 = vpop.permute.xlu0 %635
        %637 = vrot.lane.b32.xlu0 %v630, 64
        %v638 = vpop.permute.xlu0 %637
        %v641 = vadd.f32 %v359, %v636
        %v642 = vadd.f32 %v364, %v638
        %v643 = vld [vmem:[#allocation8] sm:$0xff]
        %v644 = vld [vmem:[#allocation8 + $0x8] sm:$0xff]
        %v645 = vld [vmem:[#allocation8 + $0x10] sm:$0xff]
        %v646 = vld [vmem:[#allocation8 + $0x18] sm:$0xff]
        %v647 = vld [vmem:[%s4] sm:$0x1]
        %v649 = vlaneseq
        %v650 = vshrl.u32 %v649, 7
        %v651 = vsub.s32 0, %v650
        %v652 = vrot.slane %v647, %v651
        %656 = vrot.lane.b32.xlu0 %v641, 64
        %v657 = vpop.permute.xlu0 %656
        %658 = vrot.lane.b32.xlu0 %v642, 64
        %v659 = vpop.permute.xlu0 %658
        %v660 = vsel %vm285, %v657, 0
        %v662 = vsel %vm285, %v659, 0
        %664 = vmatprep.subr.mxu0 0.0
        %665 = vmatpush1.msra.mxu0 %v643
        %666 = vmatprep.subr.mxu0 0.0
        %667 = vmatpush1.msra.mxu0 %v644
        %668 = vmatprep.subr.mxu0 0.0
        %669 = vmatpush1.msra.mxu0 %v645
        %670 = vmatprep.subr.mxu0 0.0
        %671 = vmatpush1.msra.mxu0 %v646
        %672 = vmatprep.subr.mxu0 0.0
        %673 = vmatpush1.msra.mxu0 0.0
        %674 = vmatprep.subr.mxu0 0.0
        %675 = vmatpush1.msra.mxu0 0.0
        %676 = vmatprep.subr.mxu0 0.0
        %677 = vmatpush1.msra.mxu0 0.0
        %678 = vmatprep.subr.mxu0 0.0
        %679 = vmatpush1.msra.mxu0 0.0
        %680 = vmatprep.subr.mxu0 0.0
        %681 = vmatpush1.msra.mxu0 0.0
        %682 = vmatprep.subr.mxu0 0.0
        %683 = vmatpush1.msra.mxu0 0.0
        %684 = vmatprep.subr.mxu0 0.0
        %685 = vmatpush1.msra.mxu0 0.0
        %686 = vmatprep.subr.mxu0 0.0
        %687 = vmatpush1.msra.mxu0 0.0
        %688 = vmatprep.subr.mxu0 0.0
        %689 = vmatpush1.msra.mxu0 0.0
        %690 = vmatprep.subr.mxu0 0.0
        %691 = vmatpush1.msra.mxu0 0.0
        %692 = vmatprep.subr.mxu0 0.0
        %693 = vmatpush1.msra.mxu0 0.0
        %694 = vmatprep.subr.mxu0 0.0
        %695 = vmatpush1.msra.mxu0 0.0
        %696 = vmatprep.subr.mxu0 0.0
        %697 = vmatpush1.msra.mxu0 0.0
        %698 = vmatprep.subr.mxu0 0.0
        %699 = vmatpush1.msra.mxu0 0.0
        %700 = vmatprep.subr.mxu0 0.0
        %701 = vmatpush1.msra.mxu0 0.0
        %702 = vmatprep.subr.mxu0 0.0
        %703 = vmatpush1.msra.mxu0 0.0
        %704 = vmatprep.subr.mxu0 0.0
        %705 = vmatpush1.msra.mxu0 0.0
        %706 = vmatprep.subr.mxu0 0.0
        %707 = vmatpush1.msra.mxu0 0.0
        %708 = vmatprep.subr.mxu0 0.0
        %709 = vmatpush1.msra.mxu0 0.0
        %710 = vmatprep.subr.mxu0 0.0
        %711 = vmatpush1.msra.mxu0 0.0
        %712 = vmatprep.subr.mxu0 0.0
        %713 = vmatpush1.msra.mxu0 0.0
        %714 = vmatprep.subr.mxu0 0.0
        %715 = vmatpush1.msra.mxu0 0.0
        %716 = vmatprep.subr.mxu0 0.0
        %717 = vmatpush1.msra.mxu0 0.0
        %718 = vmatprep.subr.mxu0 0.0
        %719 = vmatpush1.msra.mxu0 0.0
        %720 = vmatprep.subr.mxu0 0.0
        %721 = vmatpush1.msra.mxu0 0.0
        %722 = vmatprep.subr.mxu0 0.0
        %723 = vmatpush1.msra.mxu0 0.0
        %724 = vmatprep.subr.mxu0 0.0
        %725 = vmatpush1.msra.mxu0 0.0
        %726 = vmatprep.subr.mxu0 0.0
        %727 = vmatpush1.msra.mxu0 0.0
        %728 = vmatprep.mubr.f32.mxu0 0.0
        %729 = vmatmul.mubr.f32.gmra.mrb[0].mxu0 %v660
        %v730 = vpop.f32.mrb[0].mxu0
        %v731 = vadd.f32 %v652, %v730
        %v732 = vpop.f32.mrb[0].mxu0
        %733 = vmatprep.mubr.f32.mxu0 0.0
        %734 = vmatmul.mubr.f32.gmra.mrb[0].mxu0 %v662
        %v735 = vpop.f32.mrb[0].mxu0
        %v736 = vadd.f32 %v652, %v735
        %v737 = vpop.f32.mrb[0].mxu0
        %738 = vdwg.mxu0
        %739 = vst.msk [vmem:[%s271] sm:$0xff] %vm285, %v731
        %740 = vst.msk [vmem:[%s271 + $0x8] sm:$0xff] %vm285, %v736
        %s741 = sand.u32 %s141, 1
        %s742 = scalar_lea.sflag [#allocation5], %s741
        %s743 = sand.u32 %s141, 1
        %s744 = smul.addr %s743, 16
        %s745 = scalar_lea.vmem [#allocation9], %s744
        // Predicated region
        $region53: #{tpu_custom_call.1} parent=39 // pred_check
          %p746 = pneg %p151
        $region54: #{tpu_custom_call.1} parent=39 // pred_check_branch
          %748 = sbr.rel (%p746) target = $region56
        $region55: #{tpu_custom_call.1} parent=39 // pred_region
          %s750 = ssub.s32 256, 256
          %751 = vsyncadd %s742, %s750
          %s752 = smul.addr %s23, 2
          %s753 = smul.addr %s752, 128
          %s754 = scalar_lea.hbm %s5, %s753
          %s755 = sshll.u32 %s745, 4
          %s756 = int_to_ptr.vmem [resolvable:$true] %s755
          %761 = dma.vmem_to_hbm [thread:$0]  %s756, 256, %s754, %s742, 128, 128, 8
        $region56: #{tpu_custom_call.1} parent=39 // pred_fallthru
          _
      $region40: #{tpu_custom_call.1} parent=5 // pred_fallthru
        _
      %p762 = scmp.le.s32.totalorder 2, %s18
      // Predicated region
      $region57: #{tpu_custom_call.1} parent=5 // pred_check
        %p763 = pneg %p762
      $region58: #{tpu_custom_call.1} parent=5 // pred_check_branch
        %765 = sbr.rel (%p763) target = $region60
      $region59: #{tpu_custom_call.1} parent=5 // pred_region
        %s766 = ssub.s32 %s18, 2
        // Predicated region
        $region61: #{tpu_custom_call.1} parent=59 // pred_check
          %p767 = pneg %p157
        $region62: #{tpu_custom_call.1} parent=59 // pred_check_branch
          %769 = sbr.rel (%p767) target = $region64
        $region63: #{tpu_custom_call.1} parent=59 // pred_region
          %s770 = sand.u32 %s142, 1
          %s771 = scalar_lea.sflag [#allocation5], %s770
          %s772 = sand.u32 %s142, 1
          %s773 = smul.addr %s772, 16
          %s774 = scalar_lea.vmem [#allocation9], %s773
          %775 = dma.done %s771, 256
        $region64: #{tpu_custom_call.1} parent=59 // pred_fallthru
          _
      $region60: #{tpu_custom_call.1} parent=5 // pred_fallthru
        _
    $region6: #{tpu_custom_call.1} parent=1 // loop_footer
      %s22 = sadd.s32 1, %s18
    $region7: #{tpu_custom_call.1} parent=1 // loop_footer_branch
      %17 = sbr.rel target = $region3
    $region8: #{tpu_custom_call.1} parent=1 // loop_exit
      _
    %776 = vsyncpa [#allocation4], 1
    %s777 = scalar_lea.sflag [#allocation4], 1
    %778 = vsyncpa %s777, 1
    %779 = vsyncpa [#allocation7], 1
    %780 = vsyncpa [#allocation5], 1
    %s781 = scalar_lea.sflag [#allocation5], 1
    %782 = vsyncpa %s781, 1

// kernel: tpu_custom_call.1
$region0: #{tpu_custom_call.1}
  #allocation0 [shape = 'u32[]', space=smem, size = 0x4, offset = 0x4, fixed_abs, tag = 'smem constant byte address 0x4 - core index']
  #allocation1 [shape = 'u32[144,128]{1,0:T(1,128)}', space=vmem, size = 0x12000, scoped, tag = 'internal scratch']
  #allocation2 [shape = 'f32[16,32]{1,0:T(8,128)}', space=vmem, size = 0x2000, scoped, tag = 'scratch operand']
  %s0 = inlined_call_operand.hbm [shape: f32[2,16,32], index: 0, kind: input, shape index: {}]
  %s1 = inlined_call_operand.hbm [shape: f32[32,96], index: 1, kind: input, shape index: {}]
  %s2 = inlined_call_operand.vmem [shape: f32[1,96], index: 2, kind: input, shape index: {}]
  %s3 = inlined_call_operand.hbm [shape: f32[32,32], index: 3, kind: input, shape index: {}]
  %s4 = inlined_call_operand.vmem [shape: f32[1,32], index: 4, kind: input, shape index: {}]
  %s5 = inlined_call_operand.hbm [shape: f32[2,16,32], index: 5, kind: output, shape index: {}]
  %s6 = sld [smem:[#allocation0]]
  $region65: #{tpu_custom_call.1} parent=0
    _
  %s8 = ssub.s32 1, %s6
  %s9 = scalar_select 0, %s8, %s6
  $region1: #{tpu_custom_call.1} parent=0
    #allocation3 [shape = 'u8[16384]{0}', space=vmem, size = 0x4000, scoped, tag = 'input window, operand 0']
    #allocation4 [shape = 's32[2]{0}', space=sflag, size = 0x8, scoped, tag = 'scoped memory for tpu_custom_call.1']
    #allocation5 [shape = 's32[2]{0}', space=sflag, size = 0x8, scoped, tag = 'scoped memory for tpu_custom_call.1']
    #allocation6 [shape = 'u8[16384]{0}', space=vmem, size = 0x4000, scoped, tag = 'input window, operand 1, single buffered']
    #allocation7 [shape = 's32[1]{0}', space=sflag, size = 0x4, scoped, tag = 'scoped memory for tpu_custom_call.1']
    #allocation8 [shape = 'u8[16384]{0}', space=vmem, size = 0x4000, scoped, tag = 'input window, operand 3, single buffered']
    #allocation9 [shape = 'u8[16384]{0}', space=vmem, size = 0x4000, scoped, tag = 'output window, operand 0']
    %10 = vsyncpa [#allocation4], 0
    %s11 = scalar_lea.sflag [#allocation4], 1
    %12 = vsyncpa %s11, 0
    %13 = vsyncpa [#allocation7], 0
    %14 = vsyncpa [#allocation5], 0
    %s15 = scalar_lea.sflag [#allocation5], 1
    %16 = vsyncpa %s15, 0
    loop: start=0, step=1, limit=4
    $region2: #{tpu_custom_call.1} parent=1 // loop_pre_header
      _
    $region3: #{tpu_custom_call.1} parent=1 // loop_header
      %s18 = sphi 0, %s22
      %p19 = scmp.ge.s32.totalorder %s18, 4
      %s28 = sphi 0, %s30
      %s31 = sphi 0, %s28
      %s32 = sphi 0, %s31
      %s48 = sphi 0, %s32
      %s52 = sphi 0, %s52
      %s54 = sphi 0, %s52
      %s55 = sphi 0, %s54
      %s69 = sphi 0, %s55
      %s73 = sphi 0, %s73
      %s75 = sphi 0, %s73
      %s76 = sphi 0, %s75
      %s90 = sphi 0, %s76
      %s94 = sphi 0, %s94
      %s96 = sphi 0, %s94
      %s97 = sphi 0, %s96
      %s111 = sphi 0, %s97
      %s115 = sphi 0, %s115
      %s117 = sphi 0, %s115
      %s118 = sphi 0, %s117
      %s132 = sphi 0, %s118
      %s138 = sphi 0, %s140
      %s141 = sphi 0, %s138
      %s142 = sphi 0, %s141
      %s158 = sphi 0, %s142
    $region4: #{tpu_custom_call.1} parent=1 // loop_header_branch
      %21 = sbr.rel (%p19) target = $region8
    $region5: #{tpu_custom_call.1} parent=1 // loop_body
      %s23 = ssub.s32 %s18, 1
      %s24 = ssub.s32 %s18, 2
      %s25 = sadd.s32 %s18, 1
      %s26 = ssub.s32 %s18, %s25
      %p27 = scmp.eq.s32.totalorder %s26, 0
      %s29 = sadd.s32 %s28, 1
      %s30 = scalar_select %p27, %s28, %s29
      %p33 = pneg %p27
      %p34 = scmp.eq.s32.totalorder %s18, 1
      %p35 = por %p33, %p34
      %p36 = scmp.ne.s32.totalorder %s28, %s31
      %p37 = scmp.eq.s32.totalorder %s18, 0
      %p38 = por %p36, %p37
      %p39 = scmp.ne.s32.totalorder %s28, %s31
      %p40 = scmp.eq.s32.totalorder %s23, 1
      %p41 = por %p39, %p40
      %p42 = scmp.ne.s32.totalorder %s31, %s32
      %p43 = scmp.eq.s32.totalorder %s23, 0
      %p44 = por %p42, %p43
      %p45 = scmp.ne.s32.totalorder %s31, %s32
      %p46 = scmp.eq.s32.totalorder %s24, 1
      %p47 = por %p45, %p46
      %p49 = scmp.ne.s32.totalorder %s32, %s48
      %p50 = scmp.eq.s32.totalorder %s24, 0
      %p51 = por %p49, %p50
      %s53 = sadd.s32 %s52, 1
      %p56 = scmp.eq.s32.totalorder %s18, 1
      %p57 = scmp.ne.s32.totalorder %s52, %s54
      %p58 = scmp.eq.s32.totalorder %s18, 0
      %p59 = por %p57, %p58
      %p60 = scmp.ne.s32.totalorder %s52, %s54
      %p61 = scmp.eq.s32.totalorder %s23, 1
      %p62 = por %p60, %p61
      %p63 = scmp.ne.s32.totalorder %s54, %s55
      %p64 = scmp.eq.s32.totalorder %s23, 0
      %p65 = por %p63, %p64
      %p66 = scmp.ne.s32.totalorder %s54, %s55
      %p67 = scmp.eq.s32.totalorder %s24, 1
      %p68 = por %p66, %p67
      %p70 = scmp.ne.s32.totalorder %s55, %s69
      %p71 = scmp.eq.s32.totalorder %s24, 0
      %p72 = por %p70, %p71
      %s74 = sadd.s32 %s73, 1
      %p77 = scmp.eq.s32.totalorder %s18, 1
      %p78 = scmp.ne.s32.totalorder %s73, %s75
      %p79 = scmp.eq.s32.totalorder %s18, 0
      %p80 = por %p78, %p79
      %p81 = scmp.ne.s32.totalorder %s73, %s75
      %p82 = scmp.eq.s32.totalorder %s23, 1
      %p83 = por %p81, %p82
      %p84 = scmp.ne.s32.totalorder %s75, %s76
      %p85 = scmp.eq.s32.totalorder %s23, 0
      %p86 = por %p84, %p85
      %p87 = scmp.ne.s32.totalorder %s75, %s76
      %p88 = scmp.eq.s32.totalorder %s24, 1
      %p89 = por %p87, %p88
      %p91 = scmp.ne.s32.totalorder %s76, %s90
      %p92 = scmp.eq.s32.totalorder %s24, 0
      %p93 = por %p91, %p92
      %s95 = sadd.s32 %s94, 1
      %p98 = scmp.eq.s32.totalorder %s18, 1
      %p99 = scmp.ne.s32.totalorder %s94, %s96
      %p100 = scmp.eq.s32.totalorder %s18, 0
      %p101 = por %p99, %p100
      %p102 = scmp.ne.s32.totalorder %s94, %s96
      %p103 = scmp.eq.s32.totalorder %s23, 1
      %p104 = por %p102, %p103
      %p105 = scmp.ne.s32.totalorder %s96, %s97
      %p106 = scmp.eq.s32.totalorder %s23, 0
      %p107 = por %p105, %p106
      %p108 = scmp.ne.s32.totalorder %s96, %s97
      %p109 = scmp.eq.s32.totalorder %s24, 1
      %p110 = por %p108, %p109
      %p112 = scmp.ne.s32.totalorder %s97, %s111
      %p113 = scmp.eq.s32.totalorder %s24, 0
      %p114 = por %p112, %p113
      %s116 = sadd.s32 %s115, 1
      %p119 = scmp.eq.s32.totalorder %s18, 1
      %p120 = scmp.ne.s32.totalorder %s115, %s117
      %p121 = scmp.eq.s32.totalorder %s18, 0
      %p122 = por %p120, %p121
      %p123 = scmp.ne.s32.totalorder %s115, %s117
      %p124 = scmp.eq.s32.totalorder %s23, 1
      %p125 = por %p123, %p124
      %p126 = scmp.ne.s32.totalorder %s117, %s118
      %p127 = scmp.eq.s32.totalorder %s23, 0
      %p128 = por %p126, %p127
      %p129 = scmp.ne.s32.totalorder %s117, %s118
      %p130 = scmp.eq.s32.totalorder %s24, 1
      %p131 = por %p129, %p130
      %p133 = scmp.ne.s32.totalorder %s118, %s132
      %p134 = scmp.eq.s32.totalorder %s24, 0
      %p135 = por %p133, %p134
      %s136 = ssub.s32 %s18, %s25
      %p137 = scmp.eq.s32.totalorder %s136, 0
      %s139 = sadd.s32 %s138, 1
      %s140 = scalar_select %p137, %s138, %s139
      %p143 = pneg %p137
      %p144 = scmp.eq.s32.totalorder %s18, 1
      %p145 = por %p143, %p144
      %p146 = scmp.ne.s32.totalorder %s138, %s141
      %p147 = scmp.eq.s32.totalorder %s18, 0
      %p148 = por %p146, %p147
      %p149 = scmp.ne.s32.totalorder %s138, %s141
      %p150 = scmp.eq.s32.totalorder %s23, 1
      %p151 = por %p149, %p150
      %p152 = scmp.ne.s32.totalorder %s141, %s142
      %p153 = scmp.eq.s32.totalorder %s23, 0
      %p154 = por %p152, %p153
      %p155 = scmp.ne.s32.totalorder %s141, %s142
      %p156 = scmp.eq.s32.totalorder %s24, 1
      %p157 = por %p155, %p156
      %p159 = scmp.ne.s32.totalorder %s142, %s158
      %p160 = scmp.eq.s32.totalorder %s24, 0
      %p161 = por %p159, %p160
      %p162 = scmp.le.s32.totalorder 1, %s18
      %p163 = scmp.lt.s32.totalorder %s18, 3
      %p164 = pnand %p162, %p163
      %p165 = pneg %p164
      // Predicated region
      $region9: #{tpu_custom_call.1} parent=5 // pred_check
        _
      $region10: #{tpu_custom_call.1} parent=5 // pred_check_branch
        %167 = sbr.rel (%p164) target = $region12
      $region11: #{tpu_custom_call.1} parent=5 // pred_region
        %s168 = ssub.s32 %s18, 1
        // Predicated region
        $region13: #{tpu_custom_call.1} parent=11 // pred_check
          %p169 = pneg %p65
        $region14: #{tpu_custom_call.1} parent=11 // pred_check_branch
          %171 = sbr.rel (%p169) target = $region16
        $region15: #{tpu_custom_call.1} parent=11 // pred_region
          %s173 = ssub.s32 512, 512
          %174 = vsyncadd [#allocation7], %s173
          %s175 = sshll.u32 [#allocation6], 4
          %s176 = int_to_ptr.vmem [resolvable:$true] %s175
          %181 = dma.hbm_to_vmem [thread:$0]  %s1, 512, %s176, [#allocation7], 128, 128, 8
        $region16: #{tpu_custom_call.1} parent=11 // pred_fallthru
          _
        // Predicated region
        $region17: #{tpu_custom_call.1} parent=11 // pred_check
          %p182 = pneg %p86
        $region18: #{tpu_custom_call.1} parent=11 // pred_check_branch
          %184 = sbr.rel (%p182) target = $region20
        $region19: #{tpu_custom_call.1} parent=11 // pred_region
          _
        $region20: #{tpu_custom_call.1} parent=11 // pred_fallthru
          _
        // Predicated region
        $region21: #{tpu_custom_call.1} parent=11 // pred_check
          %p185 = pneg %p107
        $region22: #{tpu_custom_call.1} parent=11 // pred_check_branch
          %187 = sbr.rel (%p185) target = $region24
        $region23: #{tpu_custom_call.1} parent=11 // pred_region
          %s189 = ssub.s32 512, 512
          %190 = vsyncadd [#allocation7], %s189
          %s191 = sshll.u32 [#allocation8], 4
          %s192 = int_to_ptr.vmem [resolvable:$true] %s191
          %197 = dma.hbm_to_vmem [thread:$0]  %s3, 512, %s192, [#allocation7], 128, 128, 8
        $region24: #{tpu_custom_call.1} parent=11 // pred_fallthru
          _
        // Predicated region
        $region25: #{tpu_custom_call.1} parent=11 // pred_check
          %p198 = pneg %p128
        $region26: #{tpu_custom_call.1} parent=11 // pred_check_branch
          %200 = sbr.rel (%p198) target = $region28
        $region27: #{tpu_custom_call.1} parent=11 // pred_region
          _
        $region28: #{tpu_custom_call.1} parent=11 // pred_fallthru
          _
      $region12: #{tpu_custom_call.1} parent=5 // pred_fallthru
        _
      %p201 = scmp.lt.s32.totalorder %s18, 2
      // Predicated region
      $region29: #{tpu_custom_call.1} parent=5 // pred_check
        %p202 = pneg %p201
      $region30: #{tpu_custom_call.1} parent=5 // pred_check_branch
        %204 = sbr.rel (%p202) target = $region32
      $region31: #{tpu_custom_call.1} parent=5 // pred_region
        // Predicated region
        $region33: #{tpu_custom_call.1} parent=31 // pred_check
          %p205 = pneg %p38
        $region34: #{tpu_custom_call.1} parent=31 // pred_check_branch
          %207 = sbr.rel (%p205) target = $region36
        $region35: #{tpu_custom_call.1} parent=31 // pred_region
          %s208 = sand.u32 %s28, 1
          %s209 = scalar_lea.sflag [#allocation4], %s208
          %s210 = sand.u32 %s28, 1
          %s211 = smul.addr %s210, 16
          %s212 = scalar_lea.vmem [#allocation3], %s211
          %s214 = ssub.s32 256, 256
          %215 = vsyncadd %s209, %s214
          %s216 = smul.addr %s18, 2
          %s217 = smul.addr %s216, 128
          %s218 = scalar_lea.hbm %s0, %s217
          %s219 = sshll.u32 %s212, 4
          %s220 = int_to_ptr.vmem [resolvable:$true] %s219
          %225 = dma.hbm_to_vmem [thread:$0]  %s218, 256, %s220, %s209, 128, 128, 8
        $region36: #{tpu_custom_call.1} parent=31 // pred_fallthru
          _
      $region32: #{tpu_custom_call.1} parent=5 // pred_fallthru
        _
      %p226 = scmp.le.s32.totalorder 1, %s18
      %p227 = scmp.lt.s32.totalorder %s18, 3
      %p228 = pnand %p226, %p227
      %p229 = pneg %p228
      // Predicated region
      $region37: #{tpu_custom_call.1} parent=5 // pred_check
        _
      $region38: #{tpu_custom_call.1} parent=5 // pred_check_branch
        %231 = sbr.rel (%p228) target = $region40
      $region39: #{tpu_custom_call.1} parent=5 // pred_region
        %s232 = ssub.s32 %s18, 1
        %s233 = sand.u32 %s31, 1
        %s234 = scalar_lea.sflag [#allocation4], %s233
        %s235 = sand.u32 %s31, 1
        %s236 = smul.addr %s235, 16
        %s237 = scalar_lea.vmem [#allocation3], %s236
        // Predicated region
        $region41: #{tpu_custom_call.1} parent=39 // pred_check
          %p238 = pneg %p44
        $region42: #{tpu_custom_call.1} parent=39 // pred_check_branch
          %240 = sbr.rel (%p238) target = $region44
        $region43: #{tpu_custom_call.1} parent=39 // pred_region
          %241 = dma.done %s234, 256
        $region44: #{tpu_custom_call.1} parent=39 // pred_fallthru
          _
        // Predicated region
        $region45: #{tpu_custom_call.1} parent=39 // pred_check
          %p242 = pneg %p65
        $region46: #{tpu_custom_call.1} parent=39 // pred_check_branch
          %244 = sbr.rel (%p242) target = $region48
        $region47: #{tpu_custom_call.1} parent=39 // pred_region
          %245 = dma.done [#allocation7], 512
        $region48: #{tpu_custom_call.1} parent=39 // pred_fallthru
          _
        // Predicated region
        $region49: #{tpu_custom_call.1} parent=39 // pred_check
          %p246 = pneg %p107
        $region50: #{tpu_custom_call.1} parent=39 // pred_check_branch
          %248 = sbr.rel (%p246) target = $region52
        $region51: #{tpu_custom_call.1} parent=39 // pred_region
          %249 = dma.done [#allocation7], 512
        $region52: #{tpu_custom_call.1} parent=39 // pred_fallthru
          _
        %s250 = sand.u32 %s31, 1
        %s251 = scalar_lea.sflag [#allocation4], %s250
        %s252 = sand.u32 %s31, 1
        %s253 = smul.addr %s252, 16
        %s254 = scalar_lea.vmem [#allocation3], %s253
        %p255 = pneg %p44
        %p256 = pneg %p41
        %p257 = pneg %p65
        %p258 = pneg %p62
        %p259 = pneg %p86
        %p260 = pneg %p83
        %p261 = pneg %p107
        %p262 = pneg %p104
        %p263 = pneg %p128
        %p264 = pneg %p125
        %p265 = pneg %p154
        %p266 = pneg %p151
        %s267 = sand.u32 %s141, 1
        %s268 = scalar_lea.sflag [#allocation5], %s267
        %s269 = sand.u32 %s141, 1
        %s270 = smul.addr %s269, 16
        %s271 = scalar_lea.vmem [#allocation9], %s270
        %v272 = vld [vmem:[%s237] sm:$0xff]
        %v273 = vld [vmem:[%s237 + $0x8] sm:$0xff]
        %v274 = vld [vmem:[#allocation6] sm:$0xff]
        %v275 = vld [vmem:[#allocation6 + $0x8] sm:$0xff]
        %v276 = vld [vmem:[#allocation6 + $0x10] sm:$0xff]
        %v277 = vld [vmem:[#allocation6 + $0x18] sm:$0xff]
        %v278 = vld [vmem:[%s2] sm:$0x1]
        %v280 = vlaneseq
        %v281 = vshrl.u32 %v280, 7
        %v282 = vsub.s32 0, %v281
        %v283 = vrot.slane %v278, %v282
        %vm285 = vcmask 261120
        %v287 = vsel %vm285, %v272, 0
        %v290 = vsel %vm285, %v273, 0
        %292 = vmatprep.subr.mxu0 0.0
        %293 = vmatpush1.msra.mxu0 %v274
        %294 = vmatprep.subr.mxu0 0.0
        %295 = vmatpush1.msra.mxu0 %v275
        %296 = vmatprep.subr.mxu0 0.0
        %297 = vmatpush1.msra.mxu0 %v276
        %298 = vmatprep.subr.mxu0 0.0
        %299 = vmatpush1.msra.mxu0 %v277
        %300 = vmatprep.subr.mxu0 0.0
        %301 = vmatpush1.msra.mxu0 0.0
        %302 = vmatprep.subr.mxu0 0.0
        %303 = vmatpush1.msra.mxu0 0.0
        %304 = vmatprep.subr.mxu0 0.0
        %305 = vmatpush1.msra.mxu0 0.0
        %306 = vmatprep.subr.mxu0 0.0
        %307 = vmatpush1.msra.mxu0 0.0
        %308 = vmatprep.subr.mxu0 0.0
        %309 = vmatpush1.msra.mxu0 0.0
        %310 = vmatprep.subr.mxu0 0.0
        %311 = vmatpush1.msra.mxu0 0.0
        %312 = vmatprep.subr.mxu0 0.0
        %313 = vmatpush1.msra.mxu0 0.0
        %314 = vmatprep.subr.mxu0 0.0
        %315 = vmatpush1.msra.mxu0 0.0
        %316 = vmatprep.subr.mxu0 0.0
        %317 = vmatpush1.msra.mxu0 0.0
        %318 = vmatprep.subr.mxu0 0.0
        %319 = vmatpush1.msra.mxu0 0.0
        %320 = vmatprep.subr.mxu0 0.0
        %321 = vmatpush1.msra.mxu0 0.0
        %322 = vmatprep.subr.mxu0 0.0
        %323 = vmatpush1.msra.mxu0 0.0
        %324 = vmatprep.subr.mxu0 0.0
        %325 = vmatpush1.msra.mxu0 0.0
        %326 = vmatprep.subr.mxu0 0.0
        %327 = vmatpush1.msra.mxu0 0.0
        %328 = vmatprep.subr.mxu0 0.0
        %329 = vmatpush1.msra.mxu0 0.0
        %330 = vmatprep.subr.mxu0 0.0
        %331 = vmatpush1.msra.mxu0 0.0
        %332 = vmatprep.subr.mxu0 0.0
        %333 = vmatpush1.msra.mxu0 0.0
        %334 = vmatprep.subr.mxu0 0.0
        %335 = vmatpush1.msra.mxu0 0.0
        %336 = vmatprep.subr.mxu0 0.0
        %337 = vmatpush1.msra.mxu0 0.0
        %338 = vmatprep.subr.mxu0 0.0
        %339 = vmatpush1.msra.mxu0 0.0
        %340 = vmatprep.subr.mxu0 0.0
        %341 = vmatpush1.msra.mxu0 0.0
        %342 = vmatprep.subr.mxu0 0.0
        %343 = vmatpush1.msra.mxu0 0.0
        %344 = vmatprep.subr.mxu0 0.0
        %345 = vmatpush1.msra.mxu0 0.0
        %346 = vmatprep.subr.mxu0 0.0
        %347 = vmatpush1.msra.mxu0 0.0
        %348 = vmatprep.subr.mxu0 0.0
        %349 = vmatpush1.msra.mxu0 0.0
        %350 = vmatprep.subr.mxu0 0.0
        %351 = vmatpush1.msra.mxu0 0.0
        %352 = vmatprep.subr.mxu0 0.0
        %353 = vmatpush1.msra.mxu0 0.0
        %354 = vmatprep.subr.mxu0 0.0
        %355 = vmatpush1.msra.mxu0 0.0
        %356 = vmatprep.mubr.f32.mxu0 0.0
        %357 = vmatmul.mubr.f32.gmra.mrb[0].mxu0 %v287
        %v358 = vpop.f32.mrb[0].mxu0
        %v359 = vadd.f32 %v283, %v358
        %v360 = vpop.f32.mrb[0].mxu0
        %361 = vmatprep.mubr.f32.mxu0 0.0
        %362 = vmatmul.mubr.f32.gmra.mrb[0].mxu0 %v290
        %v363 = vpop.f32.mrb[0].mxu0
        %v364 = vadd.f32 %v283, %v363
        %v365 = vpop.f32.mrb[0].mxu0
        %366 = vdwg.mxu0
        %v367 = vsel %vm285, %v359, 0.0
        %368 = vadd.xlane.f32.xlu0 %v367
        %v369 = vpop.xlane.xlu0 %368
        %v370 = vsel %vm285, %v364, 0.0
        %371 = vadd.xlane.f32.xlu0 %v370
        %v372 = vpop.xlane.xlu0 %371
        %v373 = vrcp.pop 32.0
        %v374 = vmul.f32 %v369, %v373
        %v375 = vmul.f32 %v372, %v373
        %v376 = vsub.f32 %v359, %v374
        %v377 = vsub.f32 %v364, %v375
        %v378 = vmul.f32 %v376, %v376
        %v379 = vmul.f32 %v377, %v377
        %v380 = vmul.f32 %v378, %v378
        %v381 = vmul.f32 %v379, %v379
        %v382 = vsel %vm285, %v380, 0.0
        %383 = vadd.xlane.f32.xlu0 %v382
        %v384 = vpop.xlane.xlu0 %383
        %v385 = vsel %vm285, %v381, 0.0
        %386 = vadd.xlane.f32.xlu0 %v385
        %v387 = vpop.xlane.xlu0 %386
        %v388 = vmax.f32 %v384, 1e-24
        %v389 = vmax.f32 %v387, 1e-24
        %v390 = vrsqrt.pop %v388
        %v391 = vrsqrt.pop %v389
        %v392 = vmul.f32 %v390, 0.25
        %v393 = vmul.f32 %v391, 0.25
        %v394 = vmul.f32 %v378, %v392
        %v395 = vmul.f32 %v379, %v393
        %398 = vrot.lane.b32.xlu0 %v359, 96
        %v399 = vpop.permute.xlu0 %398
        %400 = vrot.lane.b32.xlu0 %v364, 96
        %v401 = vpop.permute.xlu0 %400
        %v404 = vsel %vm285, %v399, 0.0
        %405 = vadd.xlane.f32.xlu0 %v404
        %v406 = vpop.xlane.xlu0 %405
        %v407 = vsel %vm285, %v401, 0.0
        %408 = vadd.xlane.f32.xlu0 %v407
        %v409 = vpop.xlane.xlu0 %408
        %v410 = vmul.f32 %v406, %v373
        %v411 = vmul.f32 %v409, %v373
        %v412 = vsub.f32 %v359, %v410
        %v413 = vsub.f32 %v364, %v411
        %v414 = vmul.f32 %v412, %v412
        %v415 = vmul.f32 %v413, %v413
        %418 = vrot.lane.b32.xlu0 %v414, 96
        %v419 = vpop.permute.xlu0 %418
        %420 = vrot.lane.b32.xlu0 %v415, 96
        %v421 = vpop.permute.xlu0 %420
        %v424 = vsel %vm285, %v419, 0.0
        %425 = vadd.xlane.f32.xlu0 %v424
        %v426 = vpop.xlane.xlu0 %425
        %v427 = vsel %vm285, %v421, 0.0
        %428 = vadd.xlane.f32.xlu0 %v427
        %v429 = vpop.xlane.xlu0 %428
        %v430 = vadd.f32 %v426, 1e-07
        %v431 = vadd.f32 %v429, 1e-07
        %v432 = vrcp.pop %v430
        %v433 = vmul.f32 1.0, %v432
        %v434 = vrcp.pop %v431
        %v435 = vmul.f32 1.0, %v434
        %v436 = vmul.f32 %v414, %v433
        %v437 = vmul.f32 %v415, %v435
        %v438 = vmul.f32 %v436, %v436
        %v439 = vmul.f32 %v437, %v437
        %vm440 = vcmask 523520
        %v441 = vsel %vm440, %v438, 0.0
        %v442 = vsel %vm440, %v439, 0.0
        %v443 = vadd.f32 %v441, %v442
        %v444 = vrot.slane %v443, 4
        %v445 = vadd.f32 %v443, %v444
        %v446 = vrot.slane %v445, 2
        %v447 = vadd.f32 %v445, %v446
        %v448 = vrot.slane %v447, 1
        %v449 = vadd.f32 %v447, %v448
        %v450 = vmax.f32 %v449, 1e-24
        %v451 = vrsqrt.pop %v450
        %v452 = vmul.f32 %v436, %v451
        %v453 = vmul.f32 %v437, %v451
        %456 = vrot.lane.b32.xlu0 %v452, 96
        %v457 = vpop.permute.xlu0 %456
        %458 = vrot.lane.b32.xlu0 %v453, 96
        %v459 = vpop.permute.xlu0 %458
        %v461 = vsel %vm285, %v394, 0
        %v464 = vsel %vm285, %v395, 0
        %v466 = vsel %vm285, %v457, 0
        %v468 = vsel %vm285, %v459, 0
        %470 = vmatprep.subr.mxu0 0.0
        %471 = vmatpush1.xpose.msra.mxu0 %v466
        %472 = vmatprep.subr.mxu0 0.0
        %473 = vmatpush1.xpose.msra.mxu0 %v468
        %474 = vmatprep.subr.mxu0 0.0
        %475 = vmatpush1.xpose.msra.mxu0 0.0
        %476 = vmatprep.subr.mxu0 0.0
        %477 = vmatpush1.xpose.msra.mxu0 0.0
        %478 = vmatprep.subr.mxu0 0.0
        %479 = vmatpush1.xpose.msra.mxu0 0.0
        %480 = vmatprep.subr.mxu0 0.0
        %481 = vmatpush1.xpose.msra.mxu0 0.0
        %482 = vmatprep.subr.mxu0 0.0
        %483 = vmatpush1.xpose.msra.mxu0 0.0
        %484 = vmatprep.subr.mxu0 0.0
        %485 = vmatpush1.xpose.msra.mxu0 0.0
        %486 = vmatprep.subr.mxu0 0.0
        %487 = vmatpush1.xpose.msra.mxu0 0.0
        %488 = vmatprep.subr.mxu0 0.0
        %489 = vmatpush1.xpose.msra.mxu0 0.0
        %490 = vmatprep.subr.mxu0 0.0
        %491 = vmatpush1.xpose.msra.mxu0 0.0
        %492 = vmatprep.subr.mxu0 0.0
        %493 = vmatpush1.xpose.msra.mxu0 0.0
        %494 = vmatprep.subr.mxu0 0.0
        %495 = vmatpush1.xpose.msra.mxu0 0.0
        %496 = vmatprep.subr.mxu0 0.0
        %497 = vmatpush1.xpose.msra.mxu0 0.0
        %498 = vmatprep.subr.mxu0 0.0
        %499 = vmatpush1.xpose.msra.mxu0 0.0
        %500 = vmatprep.subr.mxu0 0.0
        %501 = vmatpush1.xpose.msra.mxu0 0.0
        %502 = vmatprep.subr.mxu0 0.0
        %503 = vmatpush1.xpose.msra.mxu0 0.0
        %504 = vmatprep.subr.mxu0 0.0
        %505 = vmatpush1.xpose.msra.mxu0 0.0
        %506 = vmatprep.subr.mxu0 0.0
        %507 = vmatpush1.xpose.msra.mxu0 0.0
        %508 = vmatprep.subr.mxu0 0.0
        %509 = vmatpush1.xpose.msra.mxu0 0.0
        %510 = vmatprep.subr.mxu0 0.0
        %511 = vmatpush1.xpose.msra.mxu0 0.0
        %512 = vmatprep.subr.mxu0 0.0
        %513 = vmatpush1.xpose.msra.mxu0 0.0
        %514 = vmatprep.subr.mxu0 0.0
        %515 = vmatpush1.xpose.msra.mxu0 0.0
        %516 = vmatprep.subr.mxu0 0.0
        %517 = vmatpush1.xpose.msra.mxu0 0.0
        %518 = vmatprep.subr.mxu0 0.0
        %519 = vmatpush1.xpose.msra.mxu0 0.0
        %520 = vmatprep.subr.mxu0 0.0
        %521 = vmatpush1.xpose.msra.mxu0 0.0
        %522 = vmatprep.subr.mxu0 0.0
        %523 = vmatpush1.xpose.msra.mxu0 0.0
        %524 = vmatprep.subr.mxu0 0.0
        %525 = vmatpush1.xpose.msra.mxu0 0.0
        %526 = vmatprep.subr.mxu0 0.0
        %527 = vmatpush1.xpose.msra.mxu0 0.0
        %528 = vmatprep.subr.mxu0 0.0
        %529 = vmatpush1.xpose.msra.mxu0 0.0
        %530 = vmatprep.subr.mxu0 0.0
        %531 = vmatpush1.xpose.msra.mxu0 0.0
        %532 = vmatprep.subr.mxu0 0.0
        %533 = vmatpush1.xpose.msra.mxu0 0.0
        %534 = vmatprep.mubr.f32.mxu0 0.0
        %535 = vmatmul.mubr.f32.gmra.mrb[0].mxu0 %v461
        %v536 = vpop.f32.mrb[0].mxu0
        %v537 = vadd.f32 0.0, %v536
        %v538 = vpop.f32.mrb[0].mxu0
        %539 = vmatprep.mubr.f32.mxu0 0.0
        %540 = vmatmul.mubr.f32.gmra.mrb[0].mxu0 %v464
        %v541 = vpop.f32.mrb[0].mxu0
        %v542 = vadd.f32 0.0, %v541
        %v543 = vpop.f32.mrb[0].mxu0
        %544 = vdwg.mxu0
        %545 = vrot.lane.b32.xlu0 %v359, 64
        %v546 = vpop.permute.xlu0 %545
        %547 = vrot.lane.b32.xlu0 %v364, 64
        %v548 = vpop.permute.xlu0 %547
        %vm551 = vcmask 130048
        %v553 = vsel %vm551, %v537, 0
        %v556 = vsel %vm551, %v542, 0
        %558 = vmatprep.subr.mxu0 0.0
        %559 = vmatpush1.msra.mxu0 %v546
        %560 = vmatprep.subr.mxu0 0.0
        %561 = vmatpush1.msra.mxu0 %v548
        %562 = vmatprep.subr.mxu0 0.0
        %563 = vmatpush1.msra.mxu0 0.0
        %564 = vmatprep.subr.mxu0 0.0
        %565 = vmatpush1.msra.mxu0 0.0
        %566 = vmatprep.subr.mxu0 0.0
        %567 = vmatpush1.msra.mxu0 0.0
        %568 = vmatprep.subr.mxu0 0.0
        %569 = vmatpush1.msra.mxu0 0.0
        %570 = vmatprep.subr.mxu0 0.0
        %571 = vmatpush1.msra.mxu0 0.0
        %572 = vmatprep.subr.mxu0 0.0
        %573 = vmatpush1.msra.mxu0 0.0
        %574 = vmatprep.subr.mxu0 0.0
        %575 = vmatpush1.msra.mxu0 0.0
        %576 = vmatprep.subr.mxu0 0.0
        %577 = vmatpush1.msra.mxu0 0.0
        %578 = vmatprep.subr.mxu0 0.0
        %579 = vmatpush1.msra.mxu0 0.0
        %580 = vmatprep.subr.mxu0 0.0
        %581 = vmatpush1.msra.mxu0 0.0
        %582 = vmatprep.subr.mxu0 0.0
        %583 = vmatpush1.msra.mxu0 0.0
        %584 = vmatprep.subr.mxu0 0.0
        %585 = vmatpush1.msra.mxu0 0.0
        %586 = vmatprep.subr.mxu0 0.0
        %587 = vmatpush1.msra.mxu0 0.0
        %588 = vmatprep.subr.mxu0 0.0
        %589 = vmatpush1.msra.mxu0 0.0
        %590 = vmatprep.subr.mxu0 0.0
        %591 = vmatpush1.msra.mxu0 0.0
        %592 = vmatprep.subr.mxu0 0.0
        %593 = vmatpush1.msra.mxu0 0.0
        %594 = vmatprep.subr.mxu0 0.0
        %595 = vmatpush1.msra.mxu0 0.0
        %596 = vmatprep.subr.mxu0 0.0
        %597 = vmatpush1.msra.mxu0 0.0
        %598 = vmatprep.subr.mxu0 0.0
        %599 = vmatpush1.msra.mxu0 0.0
        %600 = vmatprep.subr.mxu0 0.0
        %601 = vmatpush1.msra.mxu0 0.0
        %602 = vmatprep.subr.mxu0 0.0
        %603 = vmatpush1.msra.mxu0 0.0
        %604 = vmatprep.subr.mxu0 0.0
        %605 = vmatpush1.msra.mxu0 0.0
        %606 = vmatprep.subr.mxu0 0.0
        %607 = vmatpush1.msra.mxu0 0.0
        %608 = vmatprep.subr.mxu0 0.0
        %609 = vmatpush1.msra.mxu0 0.0
        %610 = vmatprep.subr.mxu0 0.0
        %611 = vmatpush1.msra.mxu0 0.0
        %612 = vmatprep.subr.mxu0 0.0
        %613 = vmatpush1.msra.mxu0 0.0
        %614 = vmatprep.subr.mxu0 0.0
        %615 = vmatpush1.msra.mxu0 0.0
        %616 = vmatprep.subr.mxu0 0.0
        %617 = vmatpush1.msra.mxu0 0.0
        %618 = vmatprep.subr.mxu0 0.0
        %619 = vmatpush1.msra.mxu0 0.0
        %620 = vmatprep.subr.mxu0 0.0
        %621 = vmatpush1.msra.mxu0 0.0
        %622 = vmatprep.mubr.f32.mxu0 0.0
        %623 = vmatmul.mubr.f32.gmra.mrb[0].mxu0 %v553
        %v624 = vpop.f32.mrb[0].mxu0
        %v625 = vadd.f32 0.0, %v624
        %v626 = vpop.f32.mrb[0].mxu0
        %627 = vmatprep.mubr.f32.mxu0 0.0
        %628 = vmatmul.mubr.f32.gmra.mrb[0].mxu0 %v556
        %v629 = vpop.f32.mrb[0].mxu0
        %v630 = vadd.f32 0.0, %v629
        %v631 = vpop.f32.mrb[0].mxu0
        %632 = vdwg.mxu0
        %635 = vrot.lane.b32.xlu0 %v625, 64
        %v636 = vpop.permute.xlu0 %635
        %637 = vrot.lane.b32.xlu0 %v630, 64
        %v638 = vpop.permute.xlu0 %637
        %v641 = vadd.f32 %v359, %v636
        %v642 = vadd.f32 %v364, %v638
        %v643 = vld [vmem:[#allocation8] sm:$0xff]
        %v644 = vld [vmem:[#allocation8 + $0x8] sm:$0xff]
        %v645 = vld [vmem:[#allocation8 + $0x10] sm:$0xff]
        %v646 = vld [vmem:[#allocation8 + $0x18] sm:$0xff]
        %v647 = vld [vmem:[%s4] sm:$0x1]
        %v649 = vlaneseq
        %v650 = vshrl.u32 %v649, 7
        %v651 = vsub.s32 0, %v650
        %v652 = vrot.slane %v647, %v651
        %656 = vrot.lane.b32.xlu0 %v641, 64
        %v657 = vpop.permute.xlu0 %656
        %658 = vrot.lane.b32.xlu0 %v642, 64
        %v659 = vpop.permute.xlu0 %658
        %v660 = vsel %vm285, %v657, 0
        %v662 = vsel %vm285, %v659, 0
        %664 = vmatprep.subr.mxu0 0.0
        %665 = vmatpush1.msra.mxu0 %v643
        %666 = vmatprep.subr.mxu0 0.0
        %667 = vmatpush1.msra.mxu0 %v644
        %668 = vmatprep.subr.mxu0 0.0
        %669 = vmatpush1.msra.mxu0 %v645
        %670 = vmatprep.subr.mxu0 0.0
        %671 = vmatpush1.msra.mxu0 %v646
        %672 = vmatprep.subr.mxu0 0.0
        %673 = vmatpush1.msra.mxu0 0.0
        %674 = vmatprep.subr.mxu0 0.0
        %675 = vmatpush1.msra.mxu0 0.0
        %676 = vmatprep.subr.mxu0 0.0
        %677 = vmatpush1.msra.mxu0 0.0
        %678 = vmatprep.subr.mxu0 0.0
        %679 = vmatpush1.msra.mxu0 0.0
        %680 = vmatprep.subr.mxu0 0.0
        %681 = vmatpush1.msra.mxu0 0.0
        %682 = vmatprep.subr.mxu0 0.0
        %683 = vmatpush1.msra.mxu0 0.0
        %684 = vmatprep.subr.mxu0 0.0
        %685 = vmatpush1.msra.mxu0 0.0
        %686 = vmatprep.subr.mxu0 0.0
        %687 = vmatpush1.msra.mxu0 0.0
        %688 = vmatprep.subr.mxu0 0.0
        %689 = vmatpush1.msra.mxu0 0.0
        %690 = vmatprep.subr.mxu0 0.0
        %691 = vmatpush1.msra.mxu0 0.0
        %692 = vmatprep.subr.mxu0 0.0
        %693 = vmatpush1.msra.mxu0 0.0
        %694 = vmatprep.subr.mxu0 0.0
        %695 = vmatpush1.msra.mxu0 0.0
        %696 = vmatprep.subr.mxu0 0.0
        %697 = vmatpush1.msra.mxu0 0.0
        %698 = vmatprep.subr.mxu0 0.0
        %699 = vmatpush1.msra.mxu0 0.0
        %700 = vmatprep.subr.mxu0 0.0
        %701 = vmatpush1.msra.mxu0 0.0
        %702 = vmatprep.subr.mxu0 0.0
        %703 = vmatpush1.msra.mxu0 0.0
        %704 = vmatprep.subr.mxu0 0.0
        %705 = vmatpush1.msra.mxu0 0.0
        %706 = vmatprep.subr.mxu0 0.0
        %707 = vmatpush1.msra.mxu0 0.0
        %708 = vmatprep.subr.mxu0 0.0
        %709 = vmatpush1.msra.mxu0 0.0
        %710 = vmatprep.subr.mxu0 0.0
        %711 = vmatpush1.msra.mxu0 0.0
        %712 = vmatprep.subr.mxu0 0.0
        %713 = vmatpush1.msra.mxu0 0.0
        %714 = vmatprep.subr.mxu0 0.0
        %715 = vmatpush1.msra.mxu0 0.0
        %716 = vmatprep.subr.mxu0 0.0
        %717 = vmatpush1.msra.mxu0 0.0
        %718 = vmatprep.subr.mxu0 0.0
        %719 = vmatpush1.msra.mxu0 0.0
        %720 = vmatprep.subr.mxu0 0.0
        %721 = vmatpush1.msra.mxu0 0.0
        %722 = vmatprep.subr.mxu0 0.0
        %723 = vmatpush1.msra.mxu0 0.0
        %724 = vmatprep.subr.mxu0 0.0
        %725 = vmatpush1.msra.mxu0 0.0
        %726 = vmatprep.subr.mxu0 0.0
        %727 = vmatpush1.msra.mxu0 0.0
        %728 = vmatprep.mubr.f32.mxu0 0.0
        %729 = vmatmul.mubr.f32.gmra.mrb[0].mxu0 %v660
        %v730 = vpop.f32.mrb[0].mxu0
        %v731 = vadd.f32 %v652, %v730
        %v732 = vpop.f32.mrb[0].mxu0
        %733 = vmatprep.mubr.f32.mxu0 0.0
        %734 = vmatmul.mubr.f32.gmra.mrb[0].mxu0 %v662
        %v735 = vpop.f32.mrb[0].mxu0
        %v736 = vadd.f32 %v652, %v735
        %v737 = vpop.f32.mrb[0].mxu0
        %738 = vdwg.mxu0
        %739 = vst.msk [vmem:[%s271] sm:$0xff] %vm285, %v731
        %740 = vst.msk [vmem:[%s271 + $0x8] sm:$0xff] %vm285, %v736
        %s741 = sand.u32 %s141, 1
        %s742 = scalar_lea.sflag [#allocation5], %s741
        %s743 = sand.u32 %s141, 1
        %s744 = smul.addr %s743, 16
        %s745 = scalar_lea.vmem [#allocation9], %s744
        // Predicated region
        $region53: #{tpu_custom_call.1} parent=39 // pred_check
          %p746 = pneg %p151
        $region54: #{tpu_custom_call.1} parent=39 // pred_check_branch
          %748 = sbr.rel (%p746) target = $region56
        $region55: #{tpu_custom_call.1} parent=39 // pred_region
          %s750 = ssub.s32 256, 256
          %751 = vsyncadd %s742, %s750
          %s752 = smul.addr %s23, 2
          %s753 = smul.addr %s752, 128
          %s754 = scalar_lea.hbm %s5, %s753
          %s755 = sshll.u32 %s745, 4
          %s756 = int_to_ptr.vmem [resolvable:$true] %s755
          %761 = dma.vmem_to_hbm [thread:$0]  %s756, 256, %s754, %s742, 128, 128, 8
        $region56: #{tpu_custom_call.1} parent=39 // pred_fallthru
          _
      $region40: #{tpu_custom_call.1} parent=5 // pred_fallthru
        _
      %p762 = scmp.le.s32.totalorder 2, %s18
      // Predicated region
      $region57: #{tpu_custom_call.1} parent=5 // pred_check
        %p763 = pneg %p762
      $region58: #{tpu_custom_call.1} parent=5 // pred_check_branch
        %765 = sbr.rel (%p763) target = $region60
      $region59: #{tpu_custom_call.1} parent=5 // pred_region
        %s766 = ssub.s32 %s18, 2
        // Predicated region
        $region61: #{tpu_custom_call.1} parent=59 // pred_check
          %p767 = pneg %p157
        $region62: #{tpu_custom_call.1} parent=59 // pred_check_branch
          %769 = sbr.rel (%p767) target = $region64
        $region63: #{tpu_custom_call.1} parent=59 // pred_region
          %s770 = sand.u32 %s142, 1
          %s771 = scalar_lea.sflag [#allocation5], %s770
          %s772 = sand.u32 %s142, 1
          %s773 = smul.addr %s772, 16
          %s774 = scalar_lea.vmem [#allocation9], %s773
          %775 = dma.done %s771, 256
        $region64: #{tpu_custom_call.1} parent=59 // pred_fallthru
          _
      $region60: #{tpu_custom_call.1} parent=5 // pred_fallthru
        _
    $region6: #{tpu_custom_call.1} parent=1 // loop_footer
      %s22 = sadd.s32 1, %s18
    $region7: #{tpu_custom_call.1} parent=1 // loop_footer_branch
      %17 = sbr.rel target = $region3
    $region8: #{tpu_custom_call.1} parent=1 // loop_exit
      _
    %776 = vsyncpa [#allocation4], 1
    %s777 = scalar_lea.sflag [#allocation4], 1
    %778 = vsyncpa %s777, 1
    %779 = vsyncpa [#allocation7], 1
    %780 = vsyncpa [#allocation5], 1
    %s781 = scalar_lea.sflag [#allocation5], 1
    %782 = vsyncpa %s781, 1

</llo_original>
